<compile_context>
chip_gen: v7x
topology: tpu7x:2x2x1
jax: 0.10.0
libtpu: 0.0.40
codegen_flags: <defaults>
</compile_context>

<pallas_src>
import functools

import jax
import jax.numpy as jnp
from jax.experimental import pallas as pl
from jax.experimental.pallas import tpu as pltpu


def _round_up(x, m):
    return ((x + m - 1) // m) * m


def _vmem_capacity_bytes():
    """Physical per-core VMEM; conservative 64 MiB (v7x) if the query fails."""
    try:
        info = pltpu.get_tpu_info()
        cap = getattr(info, "vmem_capacity_bytes", None)
        if cap:
            return int(cap)
    except Exception:
        pass
    return 64 << 20


def _ff_kernel(x_ref, w1_ref, b1_ref, w2_ref, b2_ref, gamma_ref, beta_ref,
               mask_ref, o_ref, h_ref, *, eps, d_in_valid, needs_mask,
               compute_dtype):
    # x row tile (f32 by default; bf16 if io_dtype=bf16).
    x = x_ref[...]

    # fc1 + ReLU: bf16 operands into the MXU, f32 accumulation.
    h = jnp.dot(x.astype(compute_dtype), w1_ref[...],
                preferred_element_type=jnp.float32)
    h = jnp.maximum(h + b1_ref[...], 0.0)
    # Stage the (tm, d_hidden) intermediate through VMEM scratch in bf16.
    h_ref[...] = h.astype(compute_dtype)

    # fc2: bf16 in / f32 accumulate.
    y = jnp.dot(h_ref[...], w2_ref[...], preferred_element_type=jnp.float32)
    y = y + b2_ref[...]

    # Dropout: eval-mode identity (inference semantics).
    # Residual add in f32. Padded feature lanes of both y and x are exactly 0.
    z = y + x.astype(jnp.float32)

    # LayerNorm over the valid feature lanes (features padded to 128 lanes).
    inv_d = jnp.float32(1.0 / d_in_valid)
    mean = jnp.sum(z, axis=-1, keepdims=True) * inv_d
    centered = z - mean
    if needs_mask:
        centered_v = centered * mask_ref[...]   # zero padded lanes (one vmul)
    else:
        centered_v = centered
    var = jnp.sum(centered_v * centered_v, axis=-1, keepdims=True) * inv_d
    zn = centered * jax.lax.rsqrt(var + eps)
    out = zn * gamma_ref[...] + beta_ref[...]   # padded gamma/beta are 0

    o_ref[...] = out.astype(o_ref.dtype)


def ff_layer(x, w1, b1, w2, b2, gamma, beta, *, eps=1e-6, tm=None,
             compute_dtype=jnp.bfloat16, io_dtype=None, out_dtype=None):
    """x: (B, S, d_in). Returns (B, S, d_in) in out_dtype (default x.dtype)."""
    B, S, d_in = x.shape
    d_hidden = w1.shape[1]
    M = B * S

    io_dtype = x.dtype if io_dtype is None else io_dtype
    out_dtype = x.dtype if out_dtype is None else out_dtype

    # Lane-dense padding: feature dims -> multiples of 128; rows -> row tile.
    # (v6e/v7x 256-wide MXUs would prefer 256-multiples on the N dims; kept
    #  at 128 — the extra weight / row traffic is not worth it at small widths.)
    d_in_p = _round_up(d_in, 128)
    d_h_p = _round_up(d_hidden, 128)

    cbytes = jnp.dtype(compute_dtype).itemsize
    x_bytes = jnp.dtype(io_dtype).itemsize
    out_bytes = jnp.dtype(out_dtype).itemsize

    vmem_cap = _vmem_capacity_bytes()
    cap_limit = int(0.85 * vmem_cap)

    def budget(tm_rows, weight_bufs):
        return (weight_bufs * 2 * d_in_p * d_h_p * cbytes          # W1 + W2
                + 2 * tm_rows * d_in_p * (x_bytes + out_bytes)     # x/out tiles (2-deep)
                + tm_rows * d_h_p * cbytes                         # bf16 h scratch
                + weight_bufs * (d_h_p + 4 * d_in_p) * 4           # b1,b2,gamma,beta,mask
                + tm_rows * (d_h_p + 2 * d_in_p) * 4)              # f32 h/y/z temporaries

    # Per-generation default row tile: 512 on 128-MiB parts, 256 on v7x.
    if tm is None:
        tm = 512 if vmem_cap >= (100 << 20) else 256

    tm_eff = min(tm, _round_up(M, 8))
    # Shrink the tile until declared buffers + f32 temporaries fit the cap.
    while tm_eff > 8 and int(1.2 * budget(tm_eff, 1)) > cap_limit:
        tm_eff = max(8, tm_eff // 2)
    # Guarantee >= 2 grid steps so v7x's second TensorCore gets work.
    if _round_up(M, tm_eff) // tm_eff < 2 and M > 8:
        tm_eff = _round_up(-(-M // 2), 8)

    M_p = _round_up(M, tm_eff)
    grid = (M_p // tm_eff,)

    x2 = jnp.pad(x.reshape(M, d_in),
                 ((0, M_p - M), (0, d_in_p - d_in))).astype(io_dtype)
    w1_p = jnp.pad(w1, ((0, d_in_p - d_in), (0, d_h_p - d_hidden))
                   ).astype(compute_dtype)
    w2_p = jnp.pad(w2, ((0, d_h_p - d_hidden), (0, d_in_p - d_in))
                   ).astype(compute_dtype)
    b1_p = jnp.pad(b1, (0, d_h_p - d_hidden)).reshape(1, d_h_p).astype(jnp.float32)
    b2_p = jnp.pad(b2, (0, d_in_p - d_in)).reshape(1, d_in_p).astype(jnp.float32)
    gamma_p = jnp.pad(gamma, (0, d_in_p - d_in)).reshape(1, d_in_p).astype(jnp.float32)
    beta_p = jnp.pad(beta, (0, d_in_p - d_in)).reshape(1, d_in_p).astype(jnp.float32)
    mask_p = (jnp.arange(d_in_p) < d_in).astype(jnp.float32).reshape(1, d_in_p)

    full = lambda i: (0, 0)

    cost = pl.CostEstimate(
        flops=4 * M_p * d_in_p * d_h_p,               # two matmuls
        transcendentals=M_p,                          # one rsqrt per row
        bytes_accessed=(M_p * d_in_p * (x_bytes + out_bytes)
                        + 2 * d_in_p * d_h_p * cbytes
                        + (d_h_p + 4 * d_in_p) * 4),
    )

    kernel = functools.partial(_ff_kernel, eps=eps, d_in_valid=d_in,
                               needs_mask=(d_in_p != d_in),
                               compute_dtype=compute_dtype)

    def _call(single_buffer_residents):
        extra = ({"pipeline_mode": pl.Buffered(1)}
                 if single_buffer_residents else {})
        wbufs = 1 if single_buffer_residents else 2
        vmem_limit = min(cap_limit,
                         max(32 << 20, int(1.2 * budget(tm_eff, wbufs)) + (2 << 20)))
        return pl.pallas_call(
            kernel,
            out_shape=jax.ShapeDtypeStruct((M_p, d_in_p), out_dtype),
            grid_spec=pltpu.PrefetchScalarGridSpec(
                num_scalar_prefetch=0,
                grid=grid,
                in_specs=[
                    pl.BlockSpec((tm_eff, d_in_p), lambda i: (i, 0)),   # x rows
                    pl.BlockSpec((d_in_p, d_h_p), full, **extra),       # W1 (resident)
                    pl.BlockSpec((1, d_h_p), full, **extra),            # b1
                    pl.BlockSpec((d_h_p, d_in_p), full, **extra),       # W2 (resident)
                    pl.BlockSpec((1, d_in_p), full, **extra),           # b2
                    pl.BlockSpec((1, d_in_p), full, **extra),           # gamma
                    pl.BlockSpec((1, d_in_p), full, **extra),           # beta
                    pl.BlockSpec((1, d_in_p), full, **extra),           # LN mask
                ],
                out_specs=pl.BlockSpec((tm_eff, d_in_p), lambda i: (i, 0)),
                scratch_shapes=[pltpu.VMEM((tm_eff, d_h_p), compute_dtype)],
            ),
            compiler_params=pltpu.CompilerParams(
                dimension_semantics=("parallel",),
                vmem_limit_bytes=vmem_limit),
            cost_estimate=cost,
        )(x2, w1_p, b1_p, w2_p, b2_p, gamma_p, beta_p, mask_p)

    try:
        out2 = _call(True)
    except Exception:
        # TODO(synk): pipeline_mode=pl.Buffered(1) unsupported on this jax
        # build — fall back to default (double-buffered) resident operands.
        out2 = _call(False)

    return out2[:M, :d_in].reshape(B, S, d_in)


def init_params(key, d_in, d_hidden):
    """Deterministic init mimicking nn.Linear defaults (uniform ±1/sqrt(fan_in))."""
    k1, k2, k3, k4 = jax.random.split(key, 4)
    lim1 = 1.0 / jnp.sqrt(d_in)
    lim2 = 1.0 / jnp.sqrt(d_hidden)
    # Weights stored as (in, out) so the kernel does x @ W directly
    # (PyTorch stores (out, in) and does x @ W.T — same math).
    w1 = jax.random.uniform(k1, (d_in, d_hidden), jnp.float32, -lim1, lim1)
    b1 = jax.random.uniform(k2, (d_hidden,), jnp.float32, -lim1, lim1)
    w2 = jax.random.uniform(k3, (d_hidden, d_in), jnp.float32, -lim2, lim2)
    b2 = jax.random.uniform(k4, (d_in,), jnp.float32, -lim2, lim2)
    gamma = jnp.ones((d_in,), jnp.float32)
    beta = jnp.zeros((d_in,), jnp.float32)
    return w1, b1, w2, b2, gamma, beta


if __name__ == "__main__":
    B, S, d_in, d_hidden = 2, 8, 32, 64
    key = jax.random.PRNGKey(0)
    kx, kp = jax.random.split(key)

    x = jax.random.normal(kx, (B, S, d_in), jnp.float32)
    w1, b1, w2, b2, gamma, beta = init_params(kp, d_in, d_hidden)

    out = ff_layer(x, w1, b1, w2, b2, gamma, beta)
    out = jax.block_until_ready(out)

    # Reference mirroring the kernel's matmul precision (bf16 in / f32 acc);
    # residual add and LayerNorm in f32 — same as the kernel.
    xf = x.reshape(-1, d_in)
    h = jnp.dot(xf.astype(jnp.bfloat16), w1.astype(jnp.bfloat16),
                preferred_element_type=jnp.float32) + b1
    h = jnp.maximum(h, 0.0).astype(jnp.bfloat16)
    y = jnp.dot(h, w2.astype(jnp.bfloat16),
                preferred_element_type=jnp.float32) + b2
    z = y + xf
    mean = jnp.mean(z, axis=-1, keepdims=True)
    var = jnp.mean((z - mean) ** 2, axis=-1, keepdims=True)
    ref = ((z - mean) * jax.lax.rsqrt(var + 1e-6) * gamma + beta
           ).reshape(B, S, d_in)

    assert jnp.allclose(out, ref, atol=1e-3, rtol=1e-3), "mismatch vs reference"

    print("KERNEL_OK")
</pallas_src>

<mosaic_0001>
module attributes {stable_mosaic.version = 11 : i64} {
  func.func @_ff_kernel(%arg0: i32, %arg1: memref<8x128xf32, #tpu.memory_space<vmem>>, %arg2: memref<128x128xbf16, #tpu.memory_space<vmem>>, %arg3: memref<1x128xf32, #tpu.memory_space<vmem>>, %arg4: memref<128x128xbf16, #tpu.memory_space<vmem>>, %arg5: memref<1x128xf32, #tpu.memory_space<vmem>>, %arg6: memref<1x128xf32, #tpu.memory_space<vmem>>, %arg7: memref<1x128xf32, #tpu.memory_space<vmem>>, %arg8: memref<1x128xf32, #tpu.memory_space<vmem>>, %arg9: memref<8x128xf32, #tpu.memory_space<vmem>>, %arg10: memref<8x128xbf16, #tpu.memory_space<vmem>>) attributes {dimension_semantics = [#tpu.dimension_semantics<parallel>], iteration_bounds = array<i64: 2>, scalar_prefetch = 0 : i64, scratch_operands = 1 : i64, tpu.core_type = #tpu.core_type<tc>, window_params = [{transform_indices = @transform_0, window_bounds = array<i64: 8, 128>}, {pipeline_mode = #tpu.pipeline_mode<synchronous>, transform_indices = @transform_1, window_bounds = array<i64: 128, 128>}, {pipeline_mode = #tpu.pipeline_mode<synchronous>, transform_indices = @transform_2, window_bounds = array<i64: 1, 128>}, {pipeline_mode = #tpu.pipeline_mode<synchronous>, transform_indices = @transform_3, window_bounds = array<i64: 128, 128>}, {pipeline_mode = #tpu.pipeline_mode<synchronous>, transform_indices = @transform_4, window_bounds = array<i64: 1, 128>}, {pipeline_mode = #tpu.pipeline_mode<synchronous>, transform_indices = @transform_5, window_bounds = array<i64: 1, 128>}, {pipeline_mode = #tpu.pipeline_mode<synchronous>, transform_indices = @transform_6, window_bounds = array<i64: 1, 128>}, {pipeline_mode = #tpu.pipeline_mode<synchronous>, transform_indices = @transform_7, window_bounds = array<i64: 1, 128>}, {transform_indices = @transform_8, window_bounds = array<i64: 8, 128>}]} {
    %c0 = arith.constant 0 : index
    %c0_0 = arith.constant 0 : index
    %0 = vector.load %arg1[%c0, %c0_0] : memref<8x128xf32, #tpu.memory_space<vmem>>, vector<8x128xf32>
    %1 = arith.truncf %0 : vector<8x128xf32> to vector<8x128xbf16>
    %c0_1 = arith.constant 0 : index
    %c0_2 = arith.constant 0 : index
    %2 = vector.load %arg2[%c0_1, %c0_2] : memref<128x128xbf16, #tpu.memory_space<vmem>>, vector<128x128xbf16>
    %cst = arith.constant dense<0.000000e+00> : vector<8x128xf32>
    %3 = tpu.matmul %1, %2, %cst {dimension_numbers = #tpu.dot_dimension_numbers<[1], [0], [0], [1], [0, 0, 1, 1], [], []>} : vector<8x128xbf16>, vector<128x128xbf16>, vector<8x128xf32> -> vector<8x128xf32>
    %c0_3 = arith.constant 0 : index
    %c0_4 = arith.constant 0 : index
    %4 = vector.load %arg3[%c0_3, %c0_4] : memref<1x128xf32, #tpu.memory_space<vmem>>, vector<1x128xf32>
    %5 = vector.broadcast %4 : vector<1x128xf32> to vector<8x128xf32>
    %6 = arith.addf %3, %5 : vector<8x128xf32>
    %cst_5 = arith.constant 0.000000e+00 : f32
    %7 = vector.broadcast %cst_5 : f32 to vector<8x128xf32>
    %8 = arith.maximumf %6, %7 : vector<8x128xf32>
    %9 = arith.truncf %8 : vector<8x128xf32> to vector<8x128xbf16>
    %c0_6 = arith.constant 0 : index
    %c0_7 = arith.constant 0 : index
    %10 = vector.load %arg10[%c0_6, %c0_7] : memref<8x128xbf16, #tpu.memory_space<vmem>>, vector<8x128xbf16>
    tpu.vector_store %arg10[%c0_6, %c0_7], %9 {strides = array<i32>} : memref<8x128xbf16, #tpu.memory_space<vmem>>, vector<8x128xbf16>,
    %c0_8 = arith.constant 0 : index
    %c0_9 = arith.constant 0 : index
    %11 = vector.load %arg10[%c0_8, %c0_9] : memref<8x128xbf16, #tpu.memory_space<vmem>>, vector<8x128xbf16>
    %c0_10 = arith.constant 0 : index
    %c0_11 = arith.constant 0 : index
    %12 = vector.load %arg4[%c0_10, %c0_11] : memref<128x128xbf16, #tpu.memory_space<vmem>>, vector<128x128xbf16>
    %cst_12 = arith.constant dense<0.000000e+00> : vector<8x128xf32>
    %13 = tpu.matmul %11, %12, %cst_12 {dimension_numbers = #tpu.dot_dimension_numbers<[1], [0], [0], [1], [0, 0, 1, 1], [], []>} : vector<8x128xbf16>, vector<128x128xbf16>, vector<8x128xf32> -> vector<8x128xf32>
    %c0_13 = arith.constant 0 : index
    %c0_14 = arith.constant 0 : index
    %14 = vector.load %arg5[%c0_13, %c0_14] : memref<1x128xf32, #tpu.memory_space<vmem>>, vector<1x128xf32>
    %15 = vector.broadcast %14 : vector<1x128xf32> to vector<8x128xf32>
    %16 = arith.addf %13, %15 : vector<8x128xf32>
    %17 = arith.addf %16, %0 : vector<8x128xf32>
    %cst_15 = arith.constant dense<0.000000e+00> : vector<8xf32>
    %18 = vector.multi_reduction <add>, %17, %cst_15 [1] : vector<8x128xf32> to vector<8xf32>
    %19 = vector.shape_cast %18 : vector<8xf32> to vector<8x1xf32>
    %cst_16 = arith.constant 3.125000e-02 : f32
    %20 = vector.broadcast %cst_16 : f32 to vector<8x1xf32>
    %21 = arith.mulf %19, %20 : vector<8x1xf32>
    %22 = vector.broadcast %21 : vector<8x1xf32> to vector<8x128xf32>
    %23 = arith.subf %17, %22 : vector<8x128xf32>
    %c0_17 = arith.constant 0 : index
    %c0_18 = arith.constant 0 : index
    %24 = vector.load %arg8[%c0_17, %c0_18] : memref<1x128xf32, #tpu.memory_space<vmem>>, vector<1x128xf32>
    %25 = vector.broadcast %24 : vector<1x128xf32> to vector<8x128xf32>
    %26 = arith.mulf %23, %25 : vector<8x128xf32>
    %27 = arith.mulf %26, %26 : vector<8x128xf32>
    %cst_19 = arith.constant dense<0.000000e+00> : vector<8xf32>
    %28 = vector.multi_reduction <add>, %27, %cst_19 [1] : vector<8x128xf32> to vector<8xf32>
    %29 = vector.shape_cast %28 : vector<8xf32> to vector<8x1xf32>
    %cst_20 = arith.constant 3.125000e-02 : f32
    %30 = vector.broadcast %cst_20 : f32 to vector<8x1xf32>
    %31 = arith.mulf %29, %30 : vector<8x1xf32>
    %cst_21 = arith.constant 9.99999997E-7 : f32
    %32 = vector.broadcast %cst_21 : f32 to vector<8x1xf32>
    %33 = arith.addf %31, %32 : vector<8x1xf32>
    %34 = math.rsqrt %33 : vector<8x1xf32>
    %35 = vector.broadcast %34 : vector<8x1xf32> to vector<8x128xf32>
    %36 = arith.mulf %23, %35 : vector<8x128xf32>
    %c0_22 = arith.constant 0 : index
    %c0_23 = arith.constant 0 : index
    %37 = vector.load %arg6[%c0_22, %c0_23] : memref<1x128xf32, #tpu.memory_space<vmem>>, vector<1x128xf32>
    %38 = vector.broadcast %37 : vector<1x128xf32> to vector<8x128xf32>
    %39 = arith.mulf %36, %38 : vector<8x128xf32>
    %c0_24 = arith.constant 0 : index
    %c0_25 = arith.constant 0 : index
    %40 = vector.load %arg7[%c0_24, %c0_25] : memref<1x128xf32, #tpu.memory_space<vmem>>, vector<1x128xf32>
    %41 = vector.broadcast %40 : vector<1x128xf32> to vector<8x128xf32>
    %42 = arith.addf %39, %41 : vector<8x128xf32>
    %c0_26 = arith.constant 0 : index
    %c0_27 = arith.constant 0 : index
    %43 = vector.load %arg9[%c0_26, %c0_27] : memref<8x128xf32, #tpu.memory_space<vmem>>, vector<8x128xf32>
    tpu.vector_store %arg9[%c0_26, %c0_27], %42 {strides = array<i32>} : memref<8x128xf32, #tpu.memory_space<vmem>>, vector<8x128xf32>,
    return
  }
  func.func @transform_0(%arg0: i32) -> (i32, i32) {
    %c0_i32 = arith.constant 0 : i32
    %c0_i32_0 = arith.constant 0 : i32
    return %arg0, %c0_i32 : i32, i32
  }
  func.func @transform_1(%arg0: i32) -> (i32, i32) {
    %c0_i32 = arith.constant 0 : i32
    %c0_i32_0 = arith.constant 0 : i32
    %c0_i32_1 = arith.constant 0 : i32
    return %c0_i32, %c0_i32_0 : i32, i32
  }
  func.func @transform_2(%arg0: i32) -> (i32, i32) {
    %c0_i32 = arith.constant 0 : i32
    %c0_i32_0 = arith.constant 0 : i32
    %c0_i32_1 = arith.constant 0 : i32
    return %c0_i32, %c0_i32_0 : i32, i32
  }
  func.func @transform_3(%arg0: i32) -> (i32, i32) {
    %c0_i32 = arith.constant 0 : i32
    %c0_i32_0 = arith.constant 0 : i32
    %c0_i32_1 = arith.constant 0 : i32
    return %c0_i32, %c0_i32_0 : i32, i32
  }
  func.func @transform_4(%arg0: i32) -> (i32, i32) {
    %c0_i32 = arith.constant 0 : i32
    %c0_i32_0 = arith.constant 0 : i32
    %c0_i32_1 = arith.constant 0 : i32
    return %c0_i32, %c0_i32_0 : i32, i32
  }
  func.func @transform_5(%arg0: i32) -> (i32, i32) {
    %c0_i32 = arith.constant 0 : i32
    %c0_i32_0 = arith.constant 0 : i32
    %c0_i32_1 = arith.constant 0 : i32
    return %c0_i32, %c0_i32_0 : i32, i32
  }
  func.func @transform_6(%arg0: i32) -> (i32, i32) {
    %c0_i32 = arith.constant 0 : i32
    %c0_i32_0 = arith.constant 0 : i32
    %c0_i32_1 = arith.constant 0 : i32
    return %c0_i32, %c0_i32_0 : i32, i32
  }
  func.func @transform_7(%arg0: i32) -> (i32, i32) {
    %c0_i32 = arith.constant 0 : i32
    %c0_i32_0 = arith.constant 0 : i32
    %c0_i32_1 = arith.constant 0 : i32
    return %c0_i32, %c0_i32_0 : i32, i32
  }
  func.func @transform_8(%arg0: i32) -> (i32, i32) {
    %c0_i32 = arith.constant 0 : i32
    %c0_i32_0 = arith.constant 0 : i32
    return %arg0, %c0_i32 : i32, i32
  }
}

module attributes {stable_mosaic.version = 11 : i64} {
  func.func @_ff_kernel(%arg0: i32, %arg1: memref<8x128xf32, #tpu.memory_space<vmem>>, %arg2: memref<128x128xbf16, #tpu.memory_space<vmem>>, %arg3: memref<1x128xf32, #tpu.memory_space<vmem>>, %arg4: memref<128x128xbf16, #tpu.memory_space<vmem>>, %arg5: memref<1x128xf32, #tpu.memory_space<vmem>>, %arg6: memref<1x128xf32, #tpu.memory_space<vmem>>, %arg7: memref<1x128xf32, #tpu.memory_space<vmem>>, %arg8: memref<1x128xf32, #tpu.memory_space<vmem>>, %arg9: memref<8x128xf32, #tpu.memory_space<vmem>>, %arg10: memref<8x128xbf16, #tpu.memory_space<vmem>>) attributes {dimension_semantics = [#tpu.dimension_semantics<parallel>], iteration_bounds = array<i64: 2>, scalar_prefetch = 0 : i64, scratch_operands = 1 : i64, tpu.core_type = #tpu.core_type<tc>, window_params = [{transform_indices = @transform_0, window_bounds = array<i64: 8, 128>}, {pipeline_mode = #tpu.pipeline_mode<synchronous>, transform_indices = @transform_1, window_bounds = array<i64: 128, 128>}, {pipeline_mode = #tpu.pipeline_mode<synchronous>, transform_indices = @transform_2, window_bounds = array<i64: 1, 128>}, {pipeline_mode = #tpu.pipeline_mode<synchronous>, transform_indices = @transform_3, window_bounds = array<i64: 128, 128>}, {pipeline_mode = #tpu.pipeline_mode<synchronous>, transform_indices = @transform_4, window_bounds = array<i64: 1, 128>}, {pipeline_mode = #tpu.pipeline_mode<synchronous>, transform_indices = @transform_5, window_bounds = array<i64: 1, 128>}, {pipeline_mode = #tpu.pipeline_mode<synchronous>, transform_indices = @transform_6, window_bounds = array<i64: 1, 128>}, {pipeline_mode = #tpu.pipeline_mode<synchronous>, transform_indices = @transform_7, window_bounds = array<i64: 1, 128>}, {transform_indices = @transform_8, window_bounds = array<i64: 8, 128>}]} {
    %c0 = arith.constant 0 : index
    %c0_0 = arith.constant 0 : index
    %0 = vector.load %arg1[%c0, %c0_0] : memref<8x128xf32, #tpu.memory_space<vmem>>, vector<8x128xf32>
    %1 = arith.truncf %0 : vector<8x128xf32> to vector<8x128xbf16>
    %c0_1 = arith.constant 0 : index
    %c0_2 = arith.constant 0 : index
    %2 = vector.load %arg2[%c0_1, %c0_2] : memref<128x128xbf16, #tpu.memory_space<vmem>>, vector<128x128xbf16>
    %cst = arith.constant dense<0.000000e+00> : vector<8x128xf32>
    %3 = tpu.matmul %1, %2, %cst {dimension_numbers = #tpu.dot_dimension_numbers<[1], [0], [0], [1], [0, 0, 1, 1], [], []>} : vector<8x128xbf16>, vector<128x128xbf16>, vector<8x128xf32> -> vector<8x128xf32>
    %c0_3 = arith.constant 0 : index
    %c0_4 = arith.constant 0 : index
    %4 = vector.load %arg3[%c0_3, %c0_4] : memref<1x128xf32, #tpu.memory_space<vmem>>, vector<1x128xf32>
    %5 = vector.broadcast %4 : vector<1x128xf32> to vector<8x128xf32>
    %6 = arith.addf %3, %5 : vector<8x128xf32>
    %cst_5 = arith.constant 0.000000e+00 : f32
    %7 = vector.broadcast %cst_5 : f32 to vector<8x128xf32>
    %8 = arith.maximumf %6, %7 : vector<8x128xf32>
    %9 = arith.truncf %8 : vector<8x128xf32> to vector<8x128xbf16>
    %c0_6 = arith.constant 0 : index
    %c0_7 = arith.constant 0 : index
    %10 = vector.load %arg10[%c0_6, %c0_7] : memref<8x128xbf16, #tpu.memory_space<vmem>>, vector<8x128xbf16>
    tpu.vector_store %arg10[%c0_6, %c0_7], %9 {strides = array<i32>} : memref<8x128xbf16, #tpu.memory_space<vmem>>, vector<8x128xbf16>,
    %c0_8 = arith.constant 0 : index
    %c0_9 = arith.constant 0 : index
    %11 = vector.load %arg10[%c0_8, %c0_9] : memref<8x128xbf16, #tpu.memory_space<vmem>>, vector<8x128xbf16>
    %c0_10 = arith.constant 0 : index
    %c0_11 = arith.constant 0 : index
    %12 = vector.load %arg4[%c0_10, %c0_11] : memref<128x128xbf16, #tpu.memory_space<vmem>>, vector<128x128xbf16>
    %cst_12 = arith.constant dense<0.000000e+00> : vector<8x128xf32>
    %13 = tpu.matmul %11, %12, %cst_12 {dimension_numbers = #tpu.dot_dimension_numbers<[1], [0], [0], [1], [0, 0, 1, 1], [], []>} : vector<8x128xbf16>, vector<128x128xbf16>, vector<8x128xf32> -> vector<8x128xf32>
    %c0_13 = arith.constant 0 : index
    %c0_14 = arith.constant 0 : index
    %14 = vector.load %arg5[%c0_13, %c0_14] : memref<1x128xf32, #tpu.memory_space<vmem>>, vector<1x128xf32>
    %15 = vector.broadcast %14 : vector<1x128xf32> to vector<8x128xf32>
    %16 = arith.addf %13, %15 : vector<8x128xf32>
    %17 = arith.addf %16, %0 : vector<8x128xf32>
    %cst_15 = arith.constant dense<0.000000e+00> : vector<8xf32>
    %18 = vector.multi_reduction <add>, %17, %cst_15 [1] : vector<8x128xf32> to vector<8xf32>
    %19 = vector.shape_cast %18 : vector<8xf32> to vector<8x1xf32>
    %cst_16 = arith.constant 3.125000e-02 : f32
    %20 = vector.broadcast %cst_16 : f32 to vector<8x1xf32>
    %21 = arith.mulf %19, %20 : vector<8x1xf32>
    %22 = vector.broadcast %21 : vector<8x1xf32> to vector<8x128xf32>
    %23 = arith.subf %17, %22 : vector<8x128xf32>
    %c0_17 = arith.constant 0 : index
    %c0_18 = arith.constant 0 : index
    %24 = vector.load %arg8[%c0_17, %c0_18] : memref<1x128xf32, #tpu.memory_space<vmem>>, vector<1x128xf32>
    %25 = vector.broadcast %24 : vector<1x128xf32> to vector<8x128xf32>
    %26 = arith.mulf %23, %25 : vector<8x128xf32>
    %27 = arith.mulf %26, %26 : vector<8x128xf32>
    %cst_19 = arith.constant dense<0.000000e+00> : vector<8xf32>
    %28 = vector.multi_reduction <add>, %27, %cst_19 [1] : vector<8x128xf32> to vector<8xf32>
    %29 = vector.shape_cast %28 : vector<8xf32> to vector<8x1xf32>
    %cst_20 = arith.constant 3.125000e-02 : f32
    %30 = vector.broadcast %cst_20 : f32 to vector<8x1xf32>
    %31 = arith.mulf %29, %30 : vector<8x1xf32>
    %cst_21 = arith.constant 9.99999997E-7 : f32
    %32 = vector.broadcast %cst_21 : f32 to vector<8x1xf32>
    %33 = arith.addf %31, %32 : vector<8x1xf32>
    %34 = math.rsqrt %33 : vector<8x1xf32>
    %35 = vector.broadcast %34 : vector<8x1xf32> to vector<8x128xf32>
    %36 = arith.mulf %23, %35 : vector<8x128xf32>
    %c0_22 = arith.constant 0 : index
    %c0_23 = arith.constant 0 : index
    %37 = vector.load %arg6[%c0_22, %c0_23] : memref<1x128xf32, #tpu.memory_space<vmem>>, vector<1x128xf32>
    %38 = vector.broadcast %37 : vector<1x128xf32> to vector<8x128xf32>
    %39 = arith.mulf %36, %38 : vector<8x128xf32>
    %c0_24 = arith.constant 0 : index
    %c0_25 = arith.constant 0 : index
    %40 = vector.load %arg7[%c0_24, %c0_25] : memref<1x128xf32, #tpu.memory_space<vmem>>, vector<1x128xf32>
    %41 = vector.broadcast %40 : vector<1x128xf32> to vector<8x128xf32>
    %42 = arith.addf %39, %41 : vector<8x128xf32>
    %c0_26 = arith.constant 0 : index
    %c0_27 = arith.constant 0 : index
    %43 = vector.load %arg9[%c0_26, %c0_27] : memref<8x128xf32, #tpu.memory_space<vmem>>, vector<8x128xf32>
    tpu.vector_store %arg9[%c0_26, %c0_27], %42 {strides = array<i32>} : memref<8x128xf32, #tpu.memory_space<vmem>>, vector<8x128xf32>,
    return
  }
  func.func @transform_0(%arg0: i32) -> (i32, i32) {
    %c0_i32 = arith.constant 0 : i32
    %c0_i32_0 = arith.constant 0 : i32
    return %arg0, %c0_i32 : i32, i32
  }
  func.func @transform_1(%arg0: i32) -> (i32, i32) {
    %c0_i32 = arith.constant 0 : i32
    %c0_i32_0 = arith.constant 0 : i32
    %c0_i32_1 = arith.constant 0 : i32
    return %c0_i32, %c0_i32_0 : i32, i32
  }
  func.func @transform_2(%arg0: i32) -> (i32, i32) {
    %c0_i32 = arith.constant 0 : i32
    %c0_i32_0 = arith.constant 0 : i32
    %c0_i32_1 = arith.constant 0 : i32
    return %c0_i32, %c0_i32_0 : i32, i32
  }
  func.func @transform_3(%arg0: i32) -> (i32, i32) {
    %c0_i32 = arith.constant 0 : i32
    %c0_i32_0 = arith.constant 0 : i32
    %c0_i32_1 = arith.constant 0 : i32
    return %c0_i32, %c0_i32_0 : i32, i32
  }
  func.func @transform_4(%arg0: i32) -> (i32, i32) {
    %c0_i32 = arith.constant 0 : i32
    %c0_i32_0 = arith.constant 0 : i32
    %c0_i32_1 = arith.constant 0 : i32
    return %c0_i32, %c0_i32_0 : i32, i32
  }
  func.func @transform_5(%arg0: i32) -> (i32, i32) {
    %c0_i32 = arith.constant 0 : i32
    %c0_i32_0 = arith.constant 0 : i32
    %c0_i32_1 = arith.constant 0 : i32
    return %c0_i32, %c0_i32_0 : i32, i32
  }
  func.func @transform_6(%arg0: i32) -> (i32, i32) {
    %c0_i32 = arith.constant 0 : i32
    %c0_i32_0 = arith.constant 0 : i32
    %c0_i32_1 = arith.constant 0 : i32
    return %c0_i32, %c0_i32_0 : i32, i32
  }
  func.func @transform_7(%arg0: i32) -> (i32, i32) {
    %c0_i32 = arith.constant 0 : i32
    %c0_i32_0 = arith.constant 0 : i32
    %c0_i32_1 = arith.constant 0 : i32
    return %c0_i32, %c0_i32_0 : i32, i32
  }
  func.func @transform_8(%arg0: i32) -> (i32, i32) {
    %c0_i32 = arith.constant 0 : i32
    %c0_i32_0 = arith.constant 0 : i32
    return %arg0, %c0_i32 : i32, i32
  }
}

</mosaic_0001>

<llo_original>
// kernel: tpu_custom_call.1
$region0: #{tpu_custom_call.1}
  #allocation0 [shape = 'u32[]', space=smem, size = 0x4, offset = 0x4, fixed_abs, tag = 'smem constant byte address 0x4 - core index']
  #allocation1 [shape = 'u32[144,128]{1,0:T(1,128)}', space=vmem, size = 0x12000, scoped, tag = 'internal scratch']
  #allocation2 [shape = 'bf16[8,128]{1,0:T(8,128)(2,1)}', space=vmem, size = 0x800, scoped, tag = 'scratch operand']
  %s0 = inlined_call_operand.hbm [shape: f32[16,128], index: 0, kind: input, shape index: {}]
  %s1 = inlined_call_operand.hbm [shape: bf16[128,128], index: 1, kind: input, shape index: {}]
  %s2 = inlined_call_operand.vmem [shape: f32[1,128], index: 2, kind: input, shape index: {}]
  %s3 = inlined_call_operand.hbm [shape: bf16[128,128], index: 3, kind: input, shape index: {}]
  %s4 = inlined_call_operand.vmem [shape: f32[1,128], index: 4, kind: input, shape index: {}]
  %s5 = inlined_call_operand.vmem [shape: f32[1,128], index: 5, kind: input, shape index: {}]
  %s6 = inlined_call_operand.vmem [shape: f32[1,128], index: 6, kind: input, shape index: {}]
  %s7 = inlined_call_operand.vmem [shape: f32[1,128], index: 7, kind: input, shape index: {}]
  %s8 = inlined_call_operand.hbm [shape: f32[16,128], index: 8, kind: output, shape index: {}]
  %s9 = sld [smem:[#allocation0]]
  $region77: #{tpu_custom_call.1} parent=0
    _
  %s11 = ssub.s32 1, %s9
  %s12 = scalar_select 0, %s11, %s9
  $region1: #{tpu_custom_call.1} parent=0
    #allocation3 [shape = 'u8[8192]{0}', space=vmem, size = 0x2000, scoped, tag = 'input window, operand 0']
    #allocation4 [shape = 's32[2]{0}', space=sflag, size = 0x8, scoped, tag = 'scoped memory for tpu_custom_call.1']
    #allocation5 [shape = 's32[2]{0}', space=sflag, size = 0x8, scoped, tag = 'scoped memory for tpu_custom_call.1']
    #allocation6 [shape = 'u8[32768]{0}', space=vmem, size = 0x8000, scoped, tag = 'input window, operand 1, single buffered']
    #allocation7 [shape = 's32[1]{0}', space=sflag, size = 0x4, scoped, tag = 'scoped memory for tpu_custom_call.1']
    #allocation8 [shape = 'u8[32768]{0}', space=vmem, size = 0x8000, scoped, tag = 'input window, operand 3, single buffered']
    #allocation9 [shape = 'u8[8192]{0}', space=vmem, size = 0x2000, scoped, tag = 'output window, operand 0']
    %13 = vsyncpa [#allocation4], 0
    %s14 = scalar_lea.sflag [#allocation4], 1
    %15 = vsyncpa %s14, 0
    %16 = vsyncpa [#allocation7], 0
    %17 = vsyncpa [#allocation5], 0
    %s18 = scalar_lea.sflag [#allocation5], 1
    %19 = vsyncpa %s18, 0
    loop: start=0, step=1, limit=4
    $region2: #{tpu_custom_call.1} parent=1 // loop_pre_header
      _
    $region3: #{tpu_custom_call.1} parent=1 // loop_header
      %s21 = sphi 0, %s25
      %p22 = scmp.ge.s32.totalorder %s21, 4
      %s31 = sphi 0, %s33
      %s34 = sphi 0, %s31
      %s35 = sphi 0, %s34
      %s51 = sphi 0, %s35
      %s55 = sphi 0, %s55
      %s57 = sphi 0, %s55
      %s58 = sphi 0, %s57
      %s72 = sphi 0, %s58
      %s76 = sphi 0, %s76
      %s78 = sphi 0, %s76
      %s79 = sphi 0, %s78
      %s93 = sphi 0, %s79
      %s97 = sphi 0, %s97
      %s99 = sphi 0, %s97
      %s100 = sphi 0, %s99
      %s114 = sphi 0, %s100
      %s118 = sphi 0, %s118
      %s120 = sphi 0, %s118
      %s121 = sphi 0, %s120
      %s135 = sphi 0, %s121
      %s139 = sphi 0, %s139
      %s141 = sphi 0, %s139
      %s142 = sphi 0, %s141
      %s156 = sphi 0, %s142
      %s160 = sphi 0, %s160
      %s162 = sphi 0, %s160
      %s163 = sphi 0, %s162
      %s177 = sphi 0, %s163
      %s181 = sphi 0, %s181
      %s183 = sphi 0, %s181
      %s184 = sphi 0, %s183
      %s198 = sphi 0, %s184
      %s204 = sphi 0, %s206
      %s207 = sphi 0, %s204
      %s208 = sphi 0, %s207
      %s224 = sphi 0, %s208
    $region4: #{tpu_custom_call.1} parent=1 // loop_header_branch
      %24 = sbr.rel (%p22) target = $region8
    $region5: #{tpu_custom_call.1} parent=1 // loop_body
      %s26 = ssub.s32 %s21, 1
      %s27 = ssub.s32 %s21, 2
      %s28 = sadd.s32 %s21, 1
      %s29 = ssub.s32 %s21, %s28
      %p30 = scmp.eq.s32.totalorder %s29, 0
      %s32 = sadd.s32 %s31, 1
      %s33 = scalar_select %p30, %s31, %s32
      %p36 = pneg %p30
      %p37 = scmp.eq.s32.totalorder %s21, 1
      %p38 = por %p36, %p37
      %p39 = scmp.ne.s32.totalorder %s31, %s34
      %p40 = scmp.eq.s32.totalorder %s21, 0
      %p41 = por %p39, %p40
      %p42 = scmp.ne.s32.totalorder %s31, %s34
      %p43 = scmp.eq.s32.totalorder %s26, 1
      %p44 = por %p42, %p43
      %p45 = scmp.ne.s32.totalorder %s34, %s35
      %p46 = scmp.eq.s32.totalorder %s26, 0
      %p47 = por %p45, %p46
      %p48 = scmp.ne.s32.totalorder %s34, %s35
      %p49 = scmp.eq.s32.totalorder %s27, 1
      %p50 = por %p48, %p49
      %p52 = scmp.ne.s32.totalorder %s35, %s51
      %p53 = scmp.eq.s32.totalorder %s27, 0
      %p54 = por %p52, %p53
      %s56 = sadd.s32 %s55, 1
      %p59 = scmp.eq.s32.totalorder %s21, 1
      %p60 = scmp.ne.s32.totalorder %s55, %s57
      %p61 = scmp.eq.s32.totalorder %s21, 0
      %p62 = por %p60, %p61
      %p63 = scmp.ne.s32.totalorder %s55, %s57
      %p64 = scmp.eq.s32.totalorder %s26, 1
      %p65 = por %p63, %p64
      %p66 = scmp.ne.s32.totalorder %s57, %s58
      %p67 = scmp.eq.s32.totalorder %s26, 0
      %p68 = por %p66, %p67
      %p69 = scmp.ne.s32.totalorder %s57, %s58
      %p70 = scmp.eq.s32.totalorder %s27, 1
      %p71 = por %p69, %p70
      %p73 = scmp.ne.s32.totalorder %s58, %s72
      %p74 = scmp.eq.s32.totalorder %s27, 0
      %p75 = por %p73, %p74
      %s77 = sadd.s32 %s76, 1
      %p80 = scmp.eq.s32.totalorder %s21, 1
      %p81 = scmp.ne.s32.totalorder %s76, %s78
      %p82 = scmp.eq.s32.totalorder %s21, 0
      %p83 = por %p81, %p82
      %p84 = scmp.ne.s32.totalorder %s76, %s78
      %p85 = scmp.eq.s32.totalorder %s26, 1
      %p86 = por %p84, %p85
      %p87 = scmp.ne.s32.totalorder %s78, %s79
      %p88 = scmp.eq.s32.totalorder %s26, 0
      %p89 = por %p87, %p88
      %p90 = scmp.ne.s32.totalorder %s78, %s79
      %p91 = scmp.eq.s32.totalorder %s27, 1
      %p92 = por %p90, %p91
      %p94 = scmp.ne.s32.totalorder %s79, %s93
      %p95 = scmp.eq.s32.totalorder %s27, 0
      %p96 = por %p94, %p95
      %s98 = sadd.s32 %s97, 1
      %p101 = scmp.eq.s32.totalorder %s21, 1
      %p102 = scmp.ne.s32.totalorder %s97, %s99
      %p103 = scmp.eq.s32.totalorder %s21, 0
      %p104 = por %p102, %p103
      %p105 = scmp.ne.s32.totalorder %s97, %s99
      %p106 = scmp.eq.s32.totalorder %s26, 1
      %p107 = por %p105, %p106
      %p108 = scmp.ne.s32.totalorder %s99, %s100
      %p109 = scmp.eq.s32.totalorder %s26, 0
      %p110 = por %p108, %p109
      %p111 = scmp.ne.s32.totalorder %s99, %s100
      %p112 = scmp.eq.s32.totalorder %s27, 1
      %p113 = por %p111, %p112
      %p115 = scmp.ne.s32.totalorder %s100, %s114
      %p116 = scmp.eq.s32.totalorder %s27, 0
      %p117 = por %p115, %p116
      %s119 = sadd.s32 %s118, 1
      %p122 = scmp.eq.s32.totalorder %s21, 1
      %p123 = scmp.ne.s32.totalorder %s118, %s120
      %p124 = scmp.eq.s32.totalorder %s21, 0
      %p125 = por %p123, %p124
      %p126 = scmp.ne.s32.totalorder %s118, %s120
      %p127 = scmp.eq.s32.totalorder %s26, 1
      %p128 = por %p126, %p127
      %p129 = scmp.ne.s32.totalorder %s120, %s121
      %p130 = scmp.eq.s32.totalorder %s26, 0
      %p131 = por %p129, %p130
      %p132 = scmp.ne.s32.totalorder %s120, %s121
      %p133 = scmp.eq.s32.totalorder %s27, 1
      %p134 = por %p132, %p133
      %p136 = scmp.ne.s32.totalorder %s121, %s135
      %p137 = scmp.eq.s32.totalorder %s27, 0
      %p138 = por %p136, %p137
      %s140 = sadd.s32 %s139, 1
      %p143 = scmp.eq.s32.totalorder %s21, 1
      %p144 = scmp.ne.s32.totalorder %s139, %s141
      %p145 = scmp.eq.s32.totalorder %s21, 0
      %p146 = por %p144, %p145
      %p147 = scmp.ne.s32.totalorder %s139, %s141
      %p148 = scmp.eq.s32.totalorder %s26, 1
      %p149 = por %p147, %p148
      %p150 = scmp.ne.s32.totalorder %s141, %s142
      %p151 = scmp.eq.s32.totalorder %s26, 0
      %p152 = por %p150, %p151
      %p153 = scmp.ne.s32.totalorder %s141, %s142
      %p154 = scmp.eq.s32.totalorder %s27, 1
      %p155 = por %p153, %p154
      %p157 = scmp.ne.s32.totalorder %s142, %s156
      %p158 = scmp.eq.s32.totalorder %s27, 0
      %p159 = por %p157, %p158
      %s161 = sadd.s32 %s160, 1
      %p164 = scmp.eq.s32.totalorder %s21, 1
      %p165 = scmp.ne.s32.totalorder %s160, %s162
      %p166 = scmp.eq.s32.totalorder %s21, 0
      %p167 = por %p165, %p166
      %p168 = scmp.ne.s32.totalorder %s160, %s162
      %p169 = scmp.eq.s32.totalorder %s26, 1
      %p170 = por %p168, %p169
      %p171 = scmp.ne.s32.totalorder %s162, %s163
      %p172 = scmp.eq.s32.totalorder %s26, 0
      %p173 = por %p171, %p172
      %p174 = scmp.ne.s32.totalorder %s162, %s163
      %p175 = scmp.eq.s32.totalorder %s27, 1
      %p176 = por %p174, %p175
      %p178 = scmp.ne.s32.totalorder %s163, %s177
      %p179 = scmp.eq.s32.totalorder %s27, 0
      %p180 = por %p178, %p179
      %s182 = sadd.s32 %s181, 1
      %p185 = scmp.eq.s32.totalorder %s21, 1
      %p186 = scmp.ne.s32.totalorder %s181, %s183
      %p187 = scmp.eq.s32.totalorder %s21, 0
      %p188 = por %p186, %p187
      %p189 = scmp.ne.s32.totalorder %s181, %s183
      %p190 = scmp.eq.s32.totalorder %s26, 1
      %p191 = por %p189, %p190
      %p192 = scmp.ne.s32.totalorder %s183, %s184
      %p193 = scmp.eq.s32.totalorder %s26, 0
      %p194 = por %p192, %p193
      %p195 = scmp.ne.s32.totalorder %s183, %s184
      %p196 = scmp.eq.s32.totalorder %s27, 1
      %p197 = por %p195, %p196
      %p199 = scmp.ne.s32.totalorder %s184, %s198
      %p200 = scmp.eq.s32.totalorder %s27, 0
      %p201 = por %p199, %p200
      %s202 = ssub.s32 %s21, %s28
      %p203 = scmp.eq.s32.totalorder %s202, 0
      %s205 = sadd.s32 %s204, 1
      %s206 = scalar_select %p203, %s204, %s205
      %p209 = pneg %p203
      %p210 = scmp.eq.s32.totalorder %s21, 1
      %p211 = por %p209, %p210
      %p212 = scmp.ne.s32.totalorder %s204, %s207
      %p213 = scmp.eq.s32.totalorder %s21, 0
      %p214 = por %p212, %p213
      %p215 = scmp.ne.s32.totalorder %s204, %s207
      %p216 = scmp.eq.s32.totalorder %s26, 1
      %p217 = por %p215, %p216
      %p218 = scmp.ne.s32.totalorder %s207, %s208
      %p219 = scmp.eq.s32.totalorder %s26, 0
      %p220 = por %p218, %p219
      %p221 = scmp.ne.s32.totalorder %s207, %s208
      %p222 = scmp.eq.s32.totalorder %s27, 1
      %p223 = por %p221, %p222
      %p225 = scmp.ne.s32.totalorder %s208, %s224
      %p226 = scmp.eq.s32.totalorder %s27, 0
      %p227 = por %p225, %p226
      %p228 = scmp.le.s32.totalorder 1, %s21
      %p229 = scmp.lt.s32.totalorder %s21, 3
      %p230 = pnand %p228, %p229
      %p231 = pneg %p230
      // Predicated region
      $region9: #{tpu_custom_call.1} parent=5 // pred_check
        _
      $region10: #{tpu_custom_call.1} parent=5 // pred_check_branch
        %233 = sbr.rel (%p230) target = $region12
      $region11: #{tpu_custom_call.1} parent=5 // pred_region
        %s234 = ssub.s32 %s21, 1
        // Predicated region
        $region13: #{tpu_custom_call.1} parent=11 // pred_check
          %p235 = pneg %p68
        $region14: #{tpu_custom_call.1} parent=11 // pred_check_branch
          %237 = sbr.rel (%p235) target = $region16
        $region15: #{tpu_custom_call.1} parent=11 // pred_region
          %s239 = ssub.s32 1024, 1024
          %240 = vsyncadd [#allocation7], %s239
          %s241 = sshll.u32 [#allocation6], 4
          %s242 = int_to_ptr.vmem [resolvable:$true] %s241
          %247 = dma.hbm_to_vmem [thread:$0]  %s1, 1024, %s242, [#allocation7], 64, 64, 4
        $region16: #{tpu_custom_call.1} parent=11 // pred_fallthru
          _
        // Predicated region
        $region17: #{tpu_custom_call.1} parent=11 // pred_check
          %p248 = pneg %p89
        $region18: #{tpu_custom_call.1} parent=11 // pred_check_branch
          %250 = sbr.rel (%p248) target = $region20
        $region19: #{tpu_custom_call.1} parent=11 // pred_region
          _
        $region20: #{tpu_custom_call.1} parent=11 // pred_fallthru
          _
        // Predicated region
        $region21: #{tpu_custom_call.1} parent=11 // pred_check
          %p251 = pneg %p110
        $region22: #{tpu_custom_call.1} parent=11 // pred_check_branch
          %253 = sbr.rel (%p251) target = $region24
        $region23: #{tpu_custom_call.1} parent=11 // pred_region
          %s255 = ssub.s32 1024, 1024
          %256 = vsyncadd [#allocation7], %s255
          %s257 = sshll.u32 [#allocation8], 4
          %s258 = int_to_ptr.vmem [resolvable:$true] %s257
          %263 = dma.hbm_to_vmem [thread:$0]  %s3, 1024, %s258, [#allocation7], 64, 64, 4
        $region24: #{tpu_custom_call.1} parent=11 // pred_fallthru
          _
        // Predicated region
        $region25: #{tpu_custom_call.1} parent=11 // pred_check
          %p264 = pneg %p131
        $region26: #{tpu_custom_call.1} parent=11 // pred_check_branch
          %266 = sbr.rel (%p264) target = $region28
        $region27: #{tpu_custom_call.1} parent=11 // pred_region
          _
        $region28: #{tpu_custom_call.1} parent=11 // pred_fallthru
          _
        // Predicated region
        $region29: #{tpu_custom_call.1} parent=11 // pred_check
          %p267 = pneg %p152
        $region30: #{tpu_custom_call.1} parent=11 // pred_check_branch
          %269 = sbr.rel (%p267) target = $region32
        $region31: #{tpu_custom_call.1} parent=11 // pred_region
          _
        $region32: #{tpu_custom_call.1} parent=11 // pred_fallthru
          _
        // Predicated region
        $region33: #{tpu_custom_call.1} parent=11 // pred_check
          %p270 = pneg %p173
        $region34: #{tpu_custom_call.1} parent=11 // pred_check_branch
          %272 = sbr.rel (%p270) target = $region36
        $region35: #{tpu_custom_call.1} parent=11 // pred_region
          _
        $region36: #{tpu_custom_call.1} parent=11 // pred_fallthru
          _
        // Predicated region
        $region37: #{tpu_custom_call.1} parent=11 // pred_check
          %p273 = pneg %p194
        $region38: #{tpu_custom_call.1} parent=11 // pred_check_branch
          %275 = sbr.rel (%p273) target = $region40
        $region39: #{tpu_custom_call.1} parent=11 // pred_region
          _
        $region40: #{tpu_custom_call.1} parent=11 // pred_fallthru
          _
      $region12: #{tpu_custom_call.1} parent=5 // pred_fallthru
        _
      %p276 = scmp.lt.s32.totalorder %s21, 2
      // Predicated region
      $region41: #{tpu_custom_call.1} parent=5 // pred_check
        %p277 = pneg %p276
      $region42: #{tpu_custom_call.1} parent=5 // pred_check_branch
        %279 = sbr.rel (%p277) target = $region44
      $region43: #{tpu_custom_call.1} parent=5 // pred_region
        // Predicated region
        $region45: #{tpu_custom_call.1} parent=43 // pred_check
          %p280 = pneg %p41
        $region46: #{tpu_custom_call.1} parent=43 // pred_check_branch
          %282 = sbr.rel (%p280) target = $region48
        $region47: #{tpu_custom_call.1} parent=43 // pred_region
          %s283 = sand.u32 %s31, 1
          %s284 = scalar_lea.sflag [#allocation4], %s283
          %s285 = sand.u32 %s31, 1
          %s286 = smul.addr %s285, 8
          %s287 = scalar_lea.vmem [#allocation3], %s286
          %s289 = ssub.s32 128, 128
          %290 = vsyncadd %s284, %s289
          %s291 = smul.addr %s21, 128
          %s292 = scalar_lea.hbm %s0, %s291
          %s294 = sshll.u32 %s287, 4
          %s295 = int_to_ptr.vmem [resolvable:$true] %s294
          %297 = dma.hbm_to_vmem [thread:$0]  %s292, 128, %s295, %s284
        $region48: #{tpu_custom_call.1} parent=43 // pred_fallthru
          _
      $region44: #{tpu_custom_call.1} parent=5 // pred_fallthru
        _
      %p298 = scmp.le.s32.totalorder 1, %s21
      %p299 = scmp.lt.s32.totalorder %s21, 3
      %p300 = pnand %p298, %p299
      %p301 = pneg %p300
      // Predicated region
      $region49: #{tpu_custom_call.1} parent=5 // pred_check
        _
      $region50: #{tpu_custom_call.1} parent=5 // pred_check_branch
        %303 = sbr.rel (%p300) target = $region52
      $region51: #{tpu_custom_call.1} parent=5 // pred_region
        %s304 = ssub.s32 %s21, 1
        %s305 = sand.u32 %s34, 1
        %s306 = scalar_lea.sflag [#allocation4], %s305
        %s307 = sand.u32 %s34, 1
        %s308 = smul.addr %s307, 8
        %s309 = scalar_lea.vmem [#allocation3], %s308
        // Predicated region
        $region53: #{tpu_custom_call.1} parent=51 // pred_check
          %p310 = pneg %p47
        $region54: #{tpu_custom_call.1} parent=51 // pred_check_branch
          %312 = sbr.rel (%p310) target = $region56
        $region55: #{tpu_custom_call.1} parent=51 // pred_region
          %313 = dma.done %s306, 128
        $region56: #{tpu_custom_call.1} parent=51 // pred_fallthru
          _
        // Predicated region
        $region57: #{tpu_custom_call.1} parent=51 // pred_check
          %p314 = pneg %p68
        $region58: #{tpu_custom_call.1} parent=51 // pred_check_branch
          %316 = sbr.rel (%p314) target = $region60
        $region59: #{tpu_custom_call.1} parent=51 // pred_region
          %317 = dma.done [#allocation7], 1024
        $region60: #{tpu_custom_call.1} parent=51 // pred_fallthru
          _
        // Predicated region
        $region61: #{tpu_custom_call.1} parent=51 // pred_check
          %p318 = pneg %p110
        $region62: #{tpu_custom_call.1} parent=51 // pred_check_branch
          %320 = sbr.rel (%p318) target = $region64
        $region63: #{tpu_custom_call.1} parent=51 // pred_region
          %321 = dma.done [#allocation7], 1024
        $region64: #{tpu_custom_call.1} parent=51 // pred_fallthru
          _
        %s322 = sand.u32 %s34, 1
        %s323 = scalar_lea.sflag [#allocation4], %s322
        %s324 = sand.u32 %s34, 1
        %s325 = smul.addr %s324, 8
        %s326 = scalar_lea.vmem [#allocation3], %s325
        %p327 = pneg %p47
        %p328 = pneg %p44
        %p329 = pneg %p68
        %p330 = pneg %p65
        %p331 = pneg %p89
        %p332 = pneg %p86
        %p333 = pneg %p110
        %p334 = pneg %p107
        %p335 = pneg %p131
        %p336 = pneg %p128
        %p337 = pneg %p152
        %p338 = pneg %p149
        %p339 = pneg %p173
        %p340 = pneg %p170
        %p341 = pneg %p194
        %p342 = pneg %p191
        %p343 = pneg %p220
        %p344 = pneg %p217
        %s345 = sand.u32 %s207, 1
        %s346 = scalar_lea.sflag [#allocation5], %s345
        %s347 = sand.u32 %s207, 1
        %s348 = smul.addr %s347, 8
        %s349 = scalar_lea.vmem [#allocation9], %s348
        %v351 = vld [vmem:[%s309] sm:$0xff]
        %v352 = vpack.c.bf16 %v351, %v351
        %v353 = vld [vmem:[#allocation6] sm:$0xf]
        %v354 = vld [vmem:[#allocation6 + $0x4] sm:$0xf]
        %v355 = vld [vmem:[#allocation6 + $0x8] sm:$0xf]
        %v356 = vld [vmem:[#allocation6 + $0xc] sm:$0xf]
        %v357 = vld [vmem:[#allocation6 + $0x10] sm:$0xf]
        %v358 = vld [vmem:[#allocation6 + $0x14] sm:$0xf]
        %v359 = vld [vmem:[#allocation6 + $0x18] sm:$0xf]
        %v360 = vld [vmem:[#allocation6 + $0x1c] sm:$0xf]
        %v361 = vld [vmem:[#allocation6 + $0x20] sm:$0xf]
        %v362 = vld [vmem:[#allocation6 + $0x24] sm:$0xf]
        %v363 = vld [vmem:[#allocation6 + $0x28] sm:$0xf]
        %v364 = vld [vmem:[#allocation6 + $0x2c] sm:$0xf]
        %v365 = vld [vmem:[#allocation6 + $0x30] sm:$0xf]
        %v366 = vld [vmem:[#allocation6 + $0x34] sm:$0xf]
        %v367 = vld [vmem:[#allocation6 + $0x38] sm:$0xf]
        %v368 = vld [vmem:[#allocation6 + $0x3c] sm:$0xf]
        %v369 = vld [vmem:[%s2] sm:$0x1]
        %v371 = vlaneseq
        %v372 = vshrl.u32 %v371, 7
        %v373 = vsub.s32 0, %v372
        %v374 = vrot.slane %v369, %v373
        %v392 = vunpack.c.l.b16 %v353
        %v393 = vunpack.c.l.b16 %v354
        %v394 = vunpack.c.l.b16 %v355
        %v395 = vunpack.c.l.b16 %v356
        %v396 = vunpack.c.l.b16 %v357
        %v397 = vunpack.c.l.b16 %v358
        %v398 = vunpack.c.l.b16 %v359
        %v399 = vunpack.c.l.b16 %v360
        %v400 = vunpack.c.l.b16 %v361
        %v401 = vunpack.c.l.b16 %v362
        %v402 = vunpack.c.l.b16 %v363
        %v403 = vunpack.c.l.b16 %v364
        %v404 = vunpack.c.l.b16 %v365
        %v405 = vunpack.c.l.b16 %v366
        %v406 = vunpack.c.l.b16 %v367
        %v407 = vunpack.c.l.b16 %v368
        %v408 = vpack.c.b16 %v393, %v392
        %v409 = vpack.c.b16 %v395, %v394
        %v410 = vpack.c.b16 %v397, %v396
        %v411 = vpack.c.b16 %v399, %v398
        %v412 = vpack.c.b16 %v401, %v400
        %v413 = vpack.c.b16 %v403, %v402
        %v414 = vpack.c.b16 %v405, %v404
        %v415 = vpack.c.b16 %v407, %v406
        %424 = vmatprep.subr.bf16.mxu0 0
        %425 = vmatpush1.bf16.msra.mxu0 %v408
        %426 = vmatprep.subr.bf16.mxu0 0
        %427 = vmatpush1.bf16.msra.mxu0 %v409
        %428 = vmatprep.subr.bf16.mxu0 0
        %429 = vmatpush1.bf16.msra.mxu0 %v410
        %430 = vmatprep.subr.bf16.mxu0 0
        %431 = vmatpush1.bf16.msra.mxu0 %v411
        %432 = vmatprep.subr.bf16.mxu0 0
        %433 = vmatpush1.bf16.msra.mxu0 %v412
        %434 = vmatprep.subr.bf16.mxu0 0
        %435 = vmatpush1.bf16.msra.mxu0 %v413
        %436 = vmatprep.subr.bf16.mxu0 0
        %437 = vmatpush1.bf16.msra.mxu0 %v414
        %438 = vmatprep.subr.bf16.mxu0 0
        %439 = vmatpush1.bf16.msra.mxu0 %v415
        %440 = vmatprep.subr.bf16.mxu0 0
        %441 = vmatpush1.bf16.msra.mxu0 0
        %442 = vmatprep.subr.bf16.mxu0 0
        %443 = vmatpush1.bf16.msra.mxu0 0
        %444 = vmatprep.subr.bf16.mxu0 0
        %445 = vmatpush1.bf16.msra.mxu0 0
        %446 = vmatprep.subr.bf16.mxu0 0
        %447 = vmatpush1.bf16.msra.mxu0 0
        %448 = vmatprep.subr.bf16.mxu0 0
        %449 = vmatpush1.bf16.msra.mxu0 0
        %450 = vmatprep.subr.bf16.mxu0 0
        %451 = vmatpush1.bf16.msra.mxu0 0
        %452 = vmatprep.subr.bf16.mxu0 0
        %453 = vmatpush1.bf16.msra.mxu0 0
        %454 = vmatprep.subr.bf16.mxu0 0
        %455 = vmatpush1.bf16.msra.mxu0 0
        %456 = vmatprep.mubr.bf16.mxu0 0
        %457 = vmatmul.mubr.bf16.gmra.mrb[0].mxu0 %v352
        %v458 = vpop.f32.mrb[0].mxu0
        %v459 = vadd.f32 %v374, %v458
        %v460 = vpop.f32.mrb[0].mxu0
        %v461 = vpop.f32.mrb[0].mxu0
        %v462 = vpop.f32.mrb[0].mxu0
        %463 = vdwg.mxu0
        %v464 = vmax.f32 %v459, 0.0
        %v465 = vpack.c.bf16 %v464, %v464
        %466 = vst [vmem:[#allocation2] sm:$0xf] %v465
        %v467 = vld [vmem:[#allocation2] sm:$0xf]
        %v468 = vld [vmem:[#allocation8] sm:$0xf]
        %v469 = vld [vmem:[#allocation8 + $0x4] sm:$0xf]
        %v470 = vld [vmem:[#allocation8 + $0x8] sm:$0xf]
        %v471 = vld [vmem:[#allocation8 + $0xc] sm:$0xf]
        %v472 = vld [vmem:[#allocation8 + $0x10] sm:$0xf]
        %v473 = vld [vmem:[#allocation8 + $0x14] sm:$0xf]
        %v474 = vld [vmem:[#allocation8 + $0x18] sm:$0xf]
        %v475 = vld [vmem:[#allocation8 + $0x1c] sm:$0xf]
        %v476 = vld [vmem:[#allocation8 + $0x20] sm:$0xf]
        %v477 = vld [vmem:[#allocation8 + $0x24] sm:$0xf]
        %v478 = vld [vmem:[#allocation8 + $0x28] sm:$0xf]
        %v479 = vld [vmem:[#allocation8 + $0x2c] sm:$0xf]
        %v480 = vld [vmem:[#allocation8 + $0x30] sm:$0xf]
        %v481 = vld [vmem:[#allocation8 + $0x34] sm:$0xf]
        %v482 = vld [vmem:[#allocation8 + $0x38] sm:$0xf]
        %v483 = vld [vmem:[#allocation8 + $0x3c] sm:$0xf]
        %v484 = vld [vmem:[%s4] sm:$0x1]
        %v486 = vlaneseq
        %v487 = vshrl.u32 %v486, 7
        %v488 = vsub.s32 0, %v487
        %v489 = vrot.slane %v484, %v488
        %v507 = vunpack.c.l.b16 %v468
        %v508 = vunpack.c.l.b16 %v469
        %v509 = vunpack.c.l.b16 %v470
        %v510 = vunpack.c.l.b16 %v471
        %v511 = vunpack.c.l.b16 %v472
        %v512 = vunpack.c.l.b16 %v473
        %v513 = vunpack.c.l.b16 %v474
        %v514 = vunpack.c.l.b16 %v475
        %v515 = vunpack.c.l.b16 %v476
        %v516 = vunpack.c.l.b16 %v477
        %v517 = vunpack.c.l.b16 %v478
        %v518 = vunpack.c.l.b16 %v479
        %v519 = vunpack.c.l.b16 %v480
        %v520 = vunpack.c.l.b16 %v481
        %v521 = vunpack.c.l.b16 %v482
        %v522 = vunpack.c.l.b16 %v483
        %v523 = vpack.c.b16 %v508, %v507
        %v524 = vpack.c.b16 %v510, %v509
        %v525 = vpack.c.b16 %v512, %v511
        %v526 = vpack.c.b16 %v514, %v513
        %v527 = vpack.c.b16 %v516, %v515
        %v528 = vpack.c.b16 %v518, %v517
        %v529 = vpack.c.b16 %v520, %v519
        %v530 = vpack.c.b16 %v522, %v521
        %539 = vmatprep.subr.bf16.mxu0 0
        %540 = vmatpush1.bf16.msra.mxu0 %v523
        %541 = vmatprep.subr.bf16.mxu0 0
        %542 = vmatpush1.bf16.msra.mxu0 %v524
        %543 = vmatprep.subr.bf16.mxu0 0
        %544 = vmatpush1.bf16.msra.mxu0 %v525
        %545 = vmatprep.subr.bf16.mxu0 0
        %546 = vmatpush1.bf16.msra.mxu0 %v526
        %547 = vmatprep.subr.bf16.mxu0 0
        %548 = vmatpush1.bf16.msra.mxu0 %v527
        %549 = vmatprep.subr.bf16.mxu0 0
        %550 = vmatpush1.bf16.msra.mxu0 %v528
        %551 = vmatprep.subr.bf16.mxu0 0
        %552 = vmatpush1.bf16.msra.mxu0 %v529
        %553 = vmatprep.subr.bf16.mxu0 0
        %554 = vmatpush1.bf16.msra.mxu0 %v530
        %555 = vmatprep.subr.bf16.mxu0 0
        %556 = vmatpush1.bf16.msra.mxu0 0
        %557 = vmatprep.subr.bf16.mxu0 0
        %558 = vmatpush1.bf16.msra.mxu0 0
        %559 = vmatprep.subr.bf16.mxu0 0
        %560 = vmatpush1.bf16.msra.mxu0 0
        %561 = vmatprep.subr.bf16.mxu0 0
        %562 = vmatpush1.bf16.msra.mxu0 0
        %563 = vmatprep.subr.bf16.mxu0 0
        %564 = vmatpush1.bf16.msra.mxu0 0
        %565 = vmatprep.subr.bf16.mxu0 0
        %566 = vmatpush1.bf16.msra.mxu0 0
        %567 = vmatprep.subr.bf16.mxu0 0
        %568 = vmatpush1.bf16.msra.mxu0 0
        %569 = vmatprep.subr.bf16.mxu0 0
        %570 = vmatpush1.bf16.msra.mxu0 0
        %571 = vmatprep.mubr.bf16.mxu0 0
        %572 = vmatmul.mubr.bf16.gmra.mrb[0].mxu0 %v467
        %v573 = vpop.f32.mrb[0].mxu0
        %v574 = vadd.f32 %v489, %v573
        %v575 = vpop.f32.mrb[0].mxu0
        %v576 = vpop.f32.mrb[0].mxu0
        %v577 = vpop.f32.mrb[0].mxu0
        %578 = vdwg.mxu0
        %v579 = vadd.f32 %v574, %v351
        %580 = vadd.xlane.f32.xlu0 %v579
        %v581 = vpop.xlane.xlu0 %580
        %v582 = vmul.f32 %v581, 0.03125
        %v583 = vsub.f32 %v579, %v582
        %v584 = vld [vmem:[%s7] sm:$0x1]
        %v586 = vlaneseq
        %v587 = vshrl.u32 %v586, 7
        %v588 = vsub.s32 0, %v587
        %v589 = vrot.slane %v584, %v588
        %v591 = vmul.f32 %v583, %v589
        %v592 = vmul.f32 %v591, %v591
        %593 = vadd.xlane.f32.xlu0 %v592
        %v594 = vpop.xlane.xlu0 %593
        %v595 = vmul.f32 %v594, 0.03125
        %v596 = vadd.f32 %v595, 1e-06
        %v597 = vrsqrt.pop %v596
        %v598 = vmul.f32 %v583, %v597
        %v599 = vld [vmem:[%s5] sm:$0x1]
        %v601 = vlaneseq
        %v602 = vshrl.u32 %v601, 7
        %v603 = vsub.s32 0, %v602
        %v604 = vrot.slane %v599, %v603
        %v606 = vmul.f32 %v598, %v604
        %v607 = vld [vmem:[%s6] sm:$0x1]
        %v609 = vlaneseq
        %v610 = vshrl.u32 %v609, 7
        %v611 = vsub.s32 0, %v610
        %v612 = vrot.slane %v607, %v611
        %v614 = vadd.f32 %v606, %v612
        %615 = vst [vmem:[%s349] sm:$0xff] %v614
        %s616 = sand.u32 %s207, 1
        %s617 = scalar_lea.sflag [#allocation5], %s616
        %s618 = sand.u32 %s207, 1
        %s619 = smul.addr %s618, 8
        %s620 = scalar_lea.vmem [#allocation9], %s619
        // Predicated region
        $region65: #{tpu_custom_call.1} parent=51 // pred_check
          %p621 = pneg %p217
        $region66: #{tpu_custom_call.1} parent=51 // pred_check_branch
          %623 = sbr.rel (%p621) target = $region68
        $region67: #{tpu_custom_call.1} parent=51 // pred_region
          %s625 = ssub.s32 128, 128
          %626 = vsyncadd %s617, %s625
          %s627 = smul.addr %s26, 128
          %s628 = scalar_lea.hbm %s8, %s627
          %s630 = sshll.u32 %s620, 4
          %s631 = int_to_ptr.vmem [resolvable:$true] %s630
          %633 = dma.vmem_to_hbm [thread:$0]  %s631, 128, %s628, %s617
        $region68: #{tpu_custom_call.1} parent=51 // pred_fallthru
          _
      $region52: #{tpu_custom_call.1} parent=5 // pred_fallthru
        _
      %p634 = scmp.le.s32.totalorder 2, %s21
      // Predicated region
      $region69: #{tpu_custom_call.1} parent=5 // pred_check
        %p635 = pneg %p634
      $region70: #{tpu_custom_call.1} parent=5 // pred_check_branch
        %637 = sbr.rel (%p635) target = $region72
      $region71: #{tpu_custom_call.1} parent=5 // pred_region
        %s638 = ssub.s32 %s21, 2
        // Predicated region
        $region73: #{tpu_custom_call.1} parent=71 // pred_check
          %p639 = pneg %p223
        $region74: #{tpu_custom_call.1} parent=71 // pred_check_branch
          %641 = sbr.rel (%p639) target = $region76
        $region75: #{tpu_custom_call.1} parent=71 // pred_region
          %s642 = sand.u32 %s208, 1
          %s643 = scalar_lea.sflag [#allocation5], %s642
          %s644 = sand.u32 %s208, 1
          %s645 = smul.addr %s644, 8
          %s646 = scalar_lea.vmem [#allocation9], %s645
          %647 = dma.done %s643, 128
        $region76: #{tpu_custom_call.1} parent=71 // pred_fallthru
          _
      $region72: #{tpu_custom_call.1} parent=5 // pred_fallthru
        _
    $region6: #{tpu_custom_call.1} parent=1 // loop_footer
      %s25 = sadd.s32 1, %s21
    $region7: #{tpu_custom_call.1} parent=1 // loop_footer_branch
      %20 = sbr.rel target = $region3
    $region8: #{tpu_custom_call.1} parent=1 // loop_exit
      _
    %648 = vsyncpa [#allocation4], 1
    %s649 = scalar_lea.sflag [#allocation4], 1
    %650 = vsyncpa %s649, 1
    %651 = vsyncpa [#allocation7], 1
    %652 = vsyncpa [#allocation5], 1
    %s653 = scalar_lea.sflag [#allocation5], 1
    %654 = vsyncpa %s653, 1

// kernel: tpu_custom_call.1
$region0: #{tpu_custom_call.1}
  #allocation0 [shape = 'u32[]', space=smem, size = 0x4, offset = 0x4, fixed_abs, tag = 'smem constant byte address 0x4 - core index']
  #allocation1 [shape = 'u32[144,128]{1,0:T(1,128)}', space=vmem, size = 0x12000, scoped, tag = 'internal scratch']
  #allocation2 [shape = 'bf16[8,128]{1,0:T(8,128)(2,1)}', space=vmem, size = 0x800, scoped, tag = 'scratch operand']
  %s0 = inlined_call_operand.hbm [shape: f32[16,128], index: 0, kind: input, shape index: {}]
  %s1 = inlined_call_operand.hbm [shape: bf16[128,128], index: 1, kind: input, shape index: {}]
  %s2 = inlined_call_operand.vmem [shape: f32[1,128], index: 2, kind: input, shape index: {}]
  %s3 = inlined_call_operand.hbm [shape: bf16[128,128], index: 3, kind: input, shape index: {}]
  %s4 = inlined_call_operand.vmem [shape: f32[1,128], index: 4, kind: input, shape index: {}]
  %s5 = inlined_call_operand.vmem [shape: f32[1,128], index: 5, kind: input, shape index: {}]
  %s6 = inlined_call_operand.vmem [shape: f32[1,128], index: 6, kind: input, shape index: {}]
  %s7 = inlined_call_operand.vmem [shape: f32[1,128], index: 7, kind: input, shape index: {}]
  %s8 = inlined_call_operand.hbm [shape: f32[16,128], index: 8, kind: output, shape index: {}]
  %s9 = sld [smem:[#allocation0]]
  $region77: #{tpu_custom_call.1} parent=0
    _
  %s11 = ssub.s32 1, %s9
  %s12 = scalar_select 0, %s11, %s9
  $region1: #{tpu_custom_call.1} parent=0
    #allocation3 [shape = 'u8[8192]{0}', space=vmem, size = 0x2000, scoped, tag = 'input window, operand 0']
    #allocation4 [shape = 's32[2]{0}', space=sflag, size = 0x8, scoped, tag = 'scoped memory for tpu_custom_call.1']
    #allocation5 [shape = 's32[2]{0}', space=sflag, size = 0x8, scoped, tag = 'scoped memory for tpu_custom_call.1']
    #allocation6 [shape = 'u8[32768]{0}', space=vmem, size = 0x8000, scoped, tag = 'input window, operand 1, single buffered']
    #allocation7 [shape = 's32[1]{0}', space=sflag, size = 0x4, scoped, tag = 'scoped memory for tpu_custom_call.1']
    #allocation8 [shape = 'u8[32768]{0}', space=vmem, size = 0x8000, scoped, tag = 'input window, operand 3, single buffered']
    #allocation9 [shape = 'u8[8192]{0}', space=vmem, size = 0x2000, scoped, tag = 'output window, operand 0']
    %13 = vsyncpa [#allocation4], 0
    %s14 = scalar_lea.sflag [#allocation4], 1
    %15 = vsyncpa %s14, 0
    %16 = vsyncpa [#allocation7], 0
    %17 = vsyncpa [#allocation5], 0
    %s18 = scalar_lea.sflag [#allocation5], 1
    %19 = vsyncpa %s18, 0
    loop: start=0, step=1, limit=4
    $region2: #{tpu_custom_call.1} parent=1 // loop_pre_header
      _
    $region3: #{tpu_custom_call.1} parent=1 // loop_header
      %s21 = sphi 0, %s25
      %p22 = scmp.ge.s32.totalorder %s21, 4
      %s31 = sphi 0, %s33
      %s34 = sphi 0, %s31
      %s35 = sphi 0, %s34
      %s51 = sphi 0, %s35
      %s55 = sphi 0, %s55
      %s57 = sphi 0, %s55
      %s58 = sphi 0, %s57
      %s72 = sphi 0, %s58
      %s76 = sphi 0, %s76
      %s78 = sphi 0, %s76
      %s79 = sphi 0, %s78
      %s93 = sphi 0, %s79
      %s97 = sphi 0, %s97
      %s99 = sphi 0, %s97
      %s100 = sphi 0, %s99
      %s114 = sphi 0, %s100
      %s118 = sphi 0, %s118
      %s120 = sphi 0, %s118
      %s121 = sphi 0, %s120
      %s135 = sphi 0, %s121
      %s139 = sphi 0, %s139
      %s141 = sphi 0, %s139
      %s142 = sphi 0, %s141
      %s156 = sphi 0, %s142
      %s160 = sphi 0, %s160
      %s162 = sphi 0, %s160
      %s163 = sphi 0, %s162
      %s177 = sphi 0, %s163
      %s181 = sphi 0, %s181
      %s183 = sphi 0, %s181
      %s184 = sphi 0, %s183
      %s198 = sphi 0, %s184
      %s204 = sphi 0, %s206
      %s207 = sphi 0, %s204
      %s208 = sphi 0, %s207
      %s224 = sphi 0, %s208
    $region4: #{tpu_custom_call.1} parent=1 // loop_header_branch
      %24 = sbr.rel (%p22) target = $region8
    $region5: #{tpu_custom_call.1} parent=1 // loop_body
      %s26 = ssub.s32 %s21, 1
      %s27 = ssub.s32 %s21, 2
      %s28 = sadd.s32 %s21, 1
      %s29 = ssub.s32 %s21, %s28
      %p30 = scmp.eq.s32.totalorder %s29, 0
      %s32 = sadd.s32 %s31, 1
      %s33 = scalar_select %p30, %s31, %s32
      %p36 = pneg %p30
      %p37 = scmp.eq.s32.totalorder %s21, 1
      %p38 = por %p36, %p37
      %p39 = scmp.ne.s32.totalorder %s31, %s34
      %p40 = scmp.eq.s32.totalorder %s21, 0
      %p41 = por %p39, %p40
      %p42 = scmp.ne.s32.totalorder %s31, %s34
      %p43 = scmp.eq.s32.totalorder %s26, 1
      %p44 = por %p42, %p43
      %p45 = scmp.ne.s32.totalorder %s34, %s35
      %p46 = scmp.eq.s32.totalorder %s26, 0
      %p47 = por %p45, %p46
      %p48 = scmp.ne.s32.totalorder %s34, %s35
      %p49 = scmp.eq.s32.totalorder %s27, 1
      %p50 = por %p48, %p49
      %p52 = scmp.ne.s32.totalorder %s35, %s51
      %p53 = scmp.eq.s32.totalorder %s27, 0
      %p54 = por %p52, %p53
      %s56 = sadd.s32 %s55, 1
      %p59 = scmp.eq.s32.totalorder %s21, 1
      %p60 = scmp.ne.s32.totalorder %s55, %s57
      %p61 = scmp.eq.s32.totalorder %s21, 0
      %p62 = por %p60, %p61
      %p63 = scmp.ne.s32.totalorder %s55, %s57
      %p64 = scmp.eq.s32.totalorder %s26, 1
      %p65 = por %p63, %p64
      %p66 = scmp.ne.s32.totalorder %s57, %s58
      %p67 = scmp.eq.s32.totalorder %s26, 0
      %p68 = por %p66, %p67
      %p69 = scmp.ne.s32.totalorder %s57, %s58
      %p70 = scmp.eq.s32.totalorder %s27, 1
      %p71 = por %p69, %p70
      %p73 = scmp.ne.s32.totalorder %s58, %s72
      %p74 = scmp.eq.s32.totalorder %s27, 0
      %p75 = por %p73, %p74
      %s77 = sadd.s32 %s76, 1
      %p80 = scmp.eq.s32.totalorder %s21, 1
      %p81 = scmp.ne.s32.totalorder %s76, %s78
      %p82 = scmp.eq.s32.totalorder %s21, 0
      %p83 = por %p81, %p82
      %p84 = scmp.ne.s32.totalorder %s76, %s78
      %p85 = scmp.eq.s32.totalorder %s26, 1
      %p86 = por %p84, %p85
      %p87 = scmp.ne.s32.totalorder %s78, %s79
      %p88 = scmp.eq.s32.totalorder %s26, 0
      %p89 = por %p87, %p88
      %p90 = scmp.ne.s32.totalorder %s78, %s79
      %p91 = scmp.eq.s32.totalorder %s27, 1
      %p92 = por %p90, %p91
      %p94 = scmp.ne.s32.totalorder %s79, %s93
      %p95 = scmp.eq.s32.totalorder %s27, 0
      %p96 = por %p94, %p95
      %s98 = sadd.s32 %s97, 1
      %p101 = scmp.eq.s32.totalorder %s21, 1
      %p102 = scmp.ne.s32.totalorder %s97, %s99
      %p103 = scmp.eq.s32.totalorder %s21, 0
      %p104 = por %p102, %p103
      %p105 = scmp.ne.s32.totalorder %s97, %s99
      %p106 = scmp.eq.s32.totalorder %s26, 1
      %p107 = por %p105, %p106
      %p108 = scmp.ne.s32.totalorder %s99, %s100
      %p109 = scmp.eq.s32.totalorder %s26, 0
      %p110 = por %p108, %p109
      %p111 = scmp.ne.s32.totalorder %s99, %s100
      %p112 = scmp.eq.s32.totalorder %s27, 1
      %p113 = por %p111, %p112
      %p115 = scmp.ne.s32.totalorder %s100, %s114
      %p116 = scmp.eq.s32.totalorder %s27, 0
      %p117 = por %p115, %p116
      %s119 = sadd.s32 %s118, 1
      %p122 = scmp.eq.s32.totalorder %s21, 1
      %p123 = scmp.ne.s32.totalorder %s118, %s120
      %p124 = scmp.eq.s32.totalorder %s21, 0
      %p125 = por %p123, %p124
      %p126 = scmp.ne.s32.totalorder %s118, %s120
      %p127 = scmp.eq.s32.totalorder %s26, 1
      %p128 = por %p126, %p127
      %p129 = scmp.ne.s32.totalorder %s120, %s121
      %p130 = scmp.eq.s32.totalorder %s26, 0
      %p131 = por %p129, %p130
      %p132 = scmp.ne.s32.totalorder %s120, %s121
      %p133 = scmp.eq.s32.totalorder %s27, 1
      %p134 = por %p132, %p133
      %p136 = scmp.ne.s32.totalorder %s121, %s135
      %p137 = scmp.eq.s32.totalorder %s27, 0
      %p138 = por %p136, %p137
      %s140 = sadd.s32 %s139, 1
      %p143 = scmp.eq.s32.totalorder %s21, 1
      %p144 = scmp.ne.s32.totalorder %s139, %s141
      %p145 = scmp.eq.s32.totalorder %s21, 0
      %p146 = por %p144, %p145
      %p147 = scmp.ne.s32.totalorder %s139, %s141
      %p148 = scmp.eq.s32.totalorder %s26, 1
      %p149 = por %p147, %p148
      %p150 = scmp.ne.s32.totalorder %s141, %s142
      %p151 = scmp.eq.s32.totalorder %s26, 0
      %p152 = por %p150, %p151
      %p153 = scmp.ne.s32.totalorder %s141, %s142
      %p154 = scmp.eq.s32.totalorder %s27, 1
      %p155 = por %p153, %p154
      %p157 = scmp.ne.s32.totalorder %s142, %s156
      %p158 = scmp.eq.s32.totalorder %s27, 0
      %p159 = por %p157, %p158
      %s161 = sadd.s32 %s160, 1
      %p164 = scmp.eq.s32.totalorder %s21, 1
      %p165 = scmp.ne.s32.totalorder %s160, %s162
      %p166 = scmp.eq.s32.totalorder %s21, 0
      %p167 = por %p165, %p166
      %p168 = scmp.ne.s32.totalorder %s160, %s162
      %p169 = scmp.eq.s32.totalorder %s26, 1
      %p170 = por %p168, %p169
      %p171 = scmp.ne.s32.totalorder %s162, %s163
      %p172 = scmp.eq.s32.totalorder %s26, 0
      %p173 = por %p171, %p172
      %p174 = scmp.ne.s32.totalorder %s162, %s163
      %p175 = scmp.eq.s32.totalorder %s27, 1
      %p176 = por %p174, %p175
      %p178 = scmp.ne.s32.totalorder %s163, %s177
      %p179 = scmp.eq.s32.totalorder %s27, 0
      %p180 = por %p178, %p179
      %s182 = sadd.s32 %s181, 1
      %p185 = scmp.eq.s32.totalorder %s21, 1
      %p186 = scmp.ne.s32.totalorder %s181, %s183
      %p187 = scmp.eq.s32.totalorder %s21, 0
      %p188 = por %p186, %p187
      %p189 = scmp.ne.s32.totalorder %s181, %s183
      %p190 = scmp.eq.s32.totalorder %s26, 1
      %p191 = por %p189, %p190
      %p192 = scmp.ne.s32.totalorder %s183, %s184
      %p193 = scmp.eq.s32.totalorder %s26, 0
      %p194 = por %p192, %p193
      %p195 = scmp.ne.s32.totalorder %s183, %s184
      %p196 = scmp.eq.s32.totalorder %s27, 1
      %p197 = por %p195, %p196
      %p199 = scmp.ne.s32.totalorder %s184, %s198
      %p200 = scmp.eq.s32.totalorder %s27, 0
      %p201 = por %p199, %p200
      %s202 = ssub.s32 %s21, %s28
      %p203 = scmp.eq.s32.totalorder %s202, 0
      %s205 = sadd.s32 %s204, 1
      %s206 = scalar_select %p203, %s204, %s205
      %p209 = pneg %p203
      %p210 = scmp.eq.s32.totalorder %s21, 1
      %p211 = por %p209, %p210
      %p212 = scmp.ne.s32.totalorder %s204, %s207
      %p213 = scmp.eq.s32.totalorder %s21, 0
      %p214 = por %p212, %p213
      %p215 = scmp.ne.s32.totalorder %s204, %s207
      %p216 = scmp.eq.s32.totalorder %s26, 1
      %p217 = por %p215, %p216
      %p218 = scmp.ne.s32.totalorder %s207, %s208
      %p219 = scmp.eq.s32.totalorder %s26, 0
      %p220 = por %p218, %p219
      %p221 = scmp.ne.s32.totalorder %s207, %s208
      %p222 = scmp.eq.s32.totalorder %s27, 1
      %p223 = por %p221, %p222
      %p225 = scmp.ne.s32.totalorder %s208, %s224
      %p226 = scmp.eq.s32.totalorder %s27, 0
      %p227 = por %p225, %p226
      %p228 = scmp.le.s32.totalorder 1, %s21
      %p229 = scmp.lt.s32.totalorder %s21, 3
      %p230 = pnand %p228, %p229
      %p231 = pneg %p230
      // Predicated region
      $region9: #{tpu_custom_call.1} parent=5 // pred_check
        _
      $region10: #{tpu_custom_call.1} parent=5 // pred_check_branch
        %233 = sbr.rel (%p230) target = $region12
      $region11: #{tpu_custom_call.1} parent=5 // pred_region
        %s234 = ssub.s32 %s21, 1
        // Predicated region
        $region13: #{tpu_custom_call.1} parent=11 // pred_check
          %p235 = pneg %p68
        $region14: #{tpu_custom_call.1} parent=11 // pred_check_branch
          %237 = sbr.rel (%p235) target = $region16
        $region15: #{tpu_custom_call.1} parent=11 // pred_region
          %s239 = ssub.s32 1024, 1024
          %240 = vsyncadd [#allocation7], %s239
          %s241 = sshll.u32 [#allocation6], 4
          %s242 = int_to_ptr.vmem [resolvable:$true] %s241
          %247 = dma.hbm_to_vmem [thread:$0]  %s1, 1024, %s242, [#allocation7], 64, 64, 4
        $region16: #{tpu_custom_call.1} parent=11 // pred_fallthru
          _
        // Predicated region
        $region17: #{tpu_custom_call.1} parent=11 // pred_check
          %p248 = pneg %p89
        $region18: #{tpu_custom_call.1} parent=11 // pred_check_branch
          %250 = sbr.rel (%p248) target = $region20
        $region19: #{tpu_custom_call.1} parent=11 // pred_region
          _
        $region20: #{tpu_custom_call.1} parent=11 // pred_fallthru
          _
        // Predicated region
        $region21: #{tpu_custom_call.1} parent=11 // pred_check
          %p251 = pneg %p110
        $region22: #{tpu_custom_call.1} parent=11 // pred_check_branch
          %253 = sbr.rel (%p251) target = $region24
        $region23: #{tpu_custom_call.1} parent=11 // pred_region
          %s255 = ssub.s32 1024, 1024
          %256 = vsyncadd [#allocation7], %s255
          %s257 = sshll.u32 [#allocation8], 4
          %s258 = int_to_ptr.vmem [resolvable:$true] %s257
          %263 = dma.hbm_to_vmem [thread:$0]  %s3, 1024, %s258, [#allocation7], 64, 64, 4
        $region24: #{tpu_custom_call.1} parent=11 // pred_fallthru
          _
        // Predicated region
        $region25: #{tpu_custom_call.1} parent=11 // pred_check
          %p264 = pneg %p131
        $region26: #{tpu_custom_call.1} parent=11 // pred_check_branch
          %266 = sbr.rel (%p264) target = $region28
        $region27: #{tpu_custom_call.1} parent=11 // pred_region
          _
        $region28: #{tpu_custom_call.1} parent=11 // pred_fallthru
          _
        // Predicated region
        $region29: #{tpu_custom_call.1} parent=11 // pred_check
          %p267 = pneg %p152
        $region30: #{tpu_custom_call.1} parent=11 // pred_check_branch
          %269 = sbr.rel (%p267) target = $region32
        $region31: #{tpu_custom_call.1} parent=11 // pred_region
          _
        $region32: #{tpu_custom_call.1} parent=11 // pred_fallthru
          _
        // Predicated region
        $region33: #{tpu_custom_call.1} parent=11 // pred_check
          %p270 = pneg %p173
        $region34: #{tpu_custom_call.1} parent=11 // pred_check_branch
          %272 = sbr.rel (%p270) target = $region36
        $region35: #{tpu_custom_call.1} parent=11 // pred_region
          _
        $region36: #{tpu_custom_call.1} parent=11 // pred_fallthru
          _
        // Predicated region
        $region37: #{tpu_custom_call.1} parent=11 // pred_check
          %p273 = pneg %p194
        $region38: #{tpu_custom_call.1} parent=11 // pred_check_branch
          %275 = sbr.rel (%p273) target = $region40
        $region39: #{tpu_custom_call.1} parent=11 // pred_region
          _
        $region40: #{tpu_custom_call.1} parent=11 // pred_fallthru
          _
      $region12: #{tpu_custom_call.1} parent=5 // pred_fallthru
        _
      %p276 = scmp.lt.s32.totalorder %s21, 2
      // Predicated region
      $region41: #{tpu_custom_call.1} parent=5 // pred_check
        %p277 = pneg %p276
      $region42: #{tpu_custom_call.1} parent=5 // pred_check_branch
        %279 = sbr.rel (%p277) target = $region44
      $region43: #{tpu_custom_call.1} parent=5 // pred_region
        // Predicated region
        $region45: #{tpu_custom_call.1} parent=43 // pred_check
          %p280 = pneg %p41
        $region46: #{tpu_custom_call.1} parent=43 // pred_check_branch
          %282 = sbr.rel (%p280) target = $region48
        $region47: #{tpu_custom_call.1} parent=43 // pred_region
          %s283 = sand.u32 %s31, 1
          %s284 = scalar_lea.sflag [#allocation4], %s283
          %s285 = sand.u32 %s31, 1
          %s286 = smul.addr %s285, 8
          %s287 = scalar_lea.vmem [#allocation3], %s286
          %s289 = ssub.s32 128, 128
          %290 = vsyncadd %s284, %s289
          %s291 = smul.addr %s21, 128
          %s292 = scalar_lea.hbm %s0, %s291
          %s294 = sshll.u32 %s287, 4
          %s295 = int_to_ptr.vmem [resolvable:$true] %s294
          %297 = dma.hbm_to_vmem [thread:$0]  %s292, 128, %s295, %s284
        $region48: #{tpu_custom_call.1} parent=43 // pred_fallthru
          _
      $region44: #{tpu_custom_call.1} parent=5 // pred_fallthru
        _
      %p298 = scmp.le.s32.totalorder 1, %s21
      %p299 = scmp.lt.s32.totalorder %s21, 3
      %p300 = pnand %p298, %p299
      %p301 = pneg %p300
      // Predicated region
      $region49: #{tpu_custom_call.1} parent=5 // pred_check
        _
      $region50: #{tpu_custom_call.1} parent=5 // pred_check_branch
        %303 = sbr.rel (%p300) target = $region52
      $region51: #{tpu_custom_call.1} parent=5 // pred_region
        %s304 = ssub.s32 %s21, 1
        %s305 = sand.u32 %s34, 1
        %s306 = scalar_lea.sflag [#allocation4], %s305
        %s307 = sand.u32 %s34, 1
        %s308 = smul.addr %s307, 8
        %s309 = scalar_lea.vmem [#allocation3], %s308
        // Predicated region
        $region53: #{tpu_custom_call.1} parent=51 // pred_check
          %p310 = pneg %p47
        $region54: #{tpu_custom_call.1} parent=51 // pred_check_branch
          %312 = sbr.rel (%p310) target = $region56
        $region55: #{tpu_custom_call.1} parent=51 // pred_region
          %313 = dma.done %s306, 128
        $region56: #{tpu_custom_call.1} parent=51 // pred_fallthru
          _
        // Predicated region
        $region57: #{tpu_custom_call.1} parent=51 // pred_check
          %p314 = pneg %p68
        $region58: #{tpu_custom_call.1} parent=51 // pred_check_branch
          %316 = sbr.rel (%p314) target = $region60
        $region59: #{tpu_custom_call.1} parent=51 // pred_region
          %317 = dma.done [#allocation7], 1024
        $region60: #{tpu_custom_call.1} parent=51 // pred_fallthru
          _
        // Predicated region
        $region61: #{tpu_custom_call.1} parent=51 // pred_check
          %p318 = pneg %p110
        $region62: #{tpu_custom_call.1} parent=51 // pred_check_branch
          %320 = sbr.rel (%p318) target = $region64
        $region63: #{tpu_custom_call.1} parent=51 // pred_region
          %321 = dma.done [#allocation7], 1024
        $region64: #{tpu_custom_call.1} parent=51 // pred_fallthru
          _
        %s322 = sand.u32 %s34, 1
        %s323 = scalar_lea.sflag [#allocation4], %s322
        %s324 = sand.u32 %s34, 1
        %s325 = smul.addr %s324, 8
        %s326 = scalar_lea.vmem [#allocation3], %s325
        %p327 = pneg %p47
        %p328 = pneg %p44
        %p329 = pneg %p68
        %p330 = pneg %p65
        %p331 = pneg %p89
        %p332 = pneg %p86
        %p333 = pneg %p110
        %p334 = pneg %p107
        %p335 = pneg %p131
        %p336 = pneg %p128
        %p337 = pneg %p152
        %p338 = pneg %p149
        %p339 = pneg %p173
        %p340 = pneg %p170
        %p341 = pneg %p194
        %p342 = pneg %p191
        %p343 = pneg %p220
        %p344 = pneg %p217
        %s345 = sand.u32 %s207, 1
        %s346 = scalar_lea.sflag [#allocation5], %s345
        %s347 = sand.u32 %s207, 1
        %s348 = smul.addr %s347, 8
        %s349 = scalar_lea.vmem [#allocation9], %s348
        %v351 = vld [vmem:[%s309] sm:$0xff]
        %v352 = vpack.c.bf16 %v351, %v351
        %v353 = vld [vmem:[#allocation6] sm:$0xf]
        %v354 = vld [vmem:[#allocation6 + $0x4] sm:$0xf]
        %v355 = vld [vmem:[#allocation6 + $0x8] sm:$0xf]
        %v356 = vld [vmem:[#allocation6 + $0xc] sm:$0xf]
        %v357 = vld [vmem:[#allocation6 + $0x10] sm:$0xf]
        %v358 = vld [vmem:[#allocation6 + $0x14] sm:$0xf]
        %v359 = vld [vmem:[#allocation6 + $0x18] sm:$0xf]
        %v360 = vld [vmem:[#allocation6 + $0x1c] sm:$0xf]
        %v361 = vld [vmem:[#allocation6 + $0x20] sm:$0xf]
        %v362 = vld [vmem:[#allocation6 + $0x24] sm:$0xf]
        %v363 = vld [vmem:[#allocation6 + $0x28] sm:$0xf]
        %v364 = vld [vmem:[#allocation6 + $0x2c] sm:$0xf]
        %v365 = vld [vmem:[#allocation6 + $0x30] sm:$0xf]
        %v366 = vld [vmem:[#allocation6 + $0x34] sm:$0xf]
        %v367 = vld [vmem:[#allocation6 + $0x38] sm:$0xf]
        %v368 = vld [vmem:[#allocation6 + $0x3c] sm:$0xf]
        %v369 = vld [vmem:[%s2] sm:$0x1]
        %v371 = vlaneseq
        %v372 = vshrl.u32 %v371, 7
        %v373 = vsub.s32 0, %v372
        %v374 = vrot.slane %v369, %v373
        %v392 = vunpack.c.l.b16 %v353
        %v393 = vunpack.c.l.b16 %v354
        %v394 = vunpack.c.l.b16 %v355
        %v395 = vunpack.c.l.b16 %v356
        %v396 = vunpack.c.l.b16 %v357
        %v397 = vunpack.c.l.b16 %v358
        %v398 = vunpack.c.l.b16 %v359
        %v399 = vunpack.c.l.b16 %v360
        %v400 = vunpack.c.l.b16 %v361
        %v401 = vunpack.c.l.b16 %v362
        %v402 = vunpack.c.l.b16 %v363
        %v403 = vunpack.c.l.b16 %v364
        %v404 = vunpack.c.l.b16 %v365
        %v405 = vunpack.c.l.b16 %v366
        %v406 = vunpack.c.l.b16 %v367
        %v407 = vunpack.c.l.b16 %v368
        %v408 = vpack.c.b16 %v393, %v392
        %v409 = vpack.c.b16 %v395, %v394
        %v410 = vpack.c.b16 %v397, %v396
        %v411 = vpack.c.b16 %v399, %v398
        %v412 = vpack.c.b16 %v401, %v400
        %v413 = vpack.c.b16 %v403, %v402
        %v414 = vpack.c.b16 %v405, %v404
        %v415 = vpack.c.b16 %v407, %v406
        %424 = vmatprep.subr.bf16.mxu0 0
        %425 = vmatpush1.bf16.msra.mxu0 %v408
        %426 = vmatprep.subr.bf16.mxu0 0
        %427 = vmatpush1.bf16.msra.mxu0 %v409
        %428 = vmatprep.subr.bf16.mxu0 0
        %429 = vmatpush1.bf16.msra.mxu0 %v410
        %430 = vmatprep.subr.bf16.mxu0 0
        %431 = vmatpush1.bf16.msra.mxu0 %v411
        %432 = vmatprep.subr.bf16.mxu0 0
        %433 = vmatpush1.bf16.msra.mxu0 %v412
        %434 = vmatprep.subr.bf16.mxu0 0
        %435 = vmatpush1.bf16.msra.mxu0 %v413
        %436 = vmatprep.subr.bf16.mxu0 0
        %437 = vmatpush1.bf16.msra.mxu0 %v414
        %438 = vmatprep.subr.bf16.mxu0 0
        %439 = vmatpush1.bf16.msra.mxu0 %v415
        %440 = vmatprep.subr.bf16.mxu0 0
        %441 = vmatpush1.bf16.msra.mxu0 0
        %442 = vmatprep.subr.bf16.mxu0 0
        %443 = vmatpush1.bf16.msra.mxu0 0
        %444 = vmatprep.subr.bf16.mxu0 0
        %445 = vmatpush1.bf16.msra.mxu0 0
        %446 = vmatprep.subr.bf16.mxu0 0
        %447 = vmatpush1.bf16.msra.mxu0 0
        %448 = vmatprep.subr.bf16.mxu0 0
        %449 = vmatpush1.bf16.msra.mxu0 0
        %450 = vmatprep.subr.bf16.mxu0 0
        %451 = vmatpush1.bf16.msra.mxu0 0
        %452 = vmatprep.subr.bf16.mxu0 0
        %453 = vmatpush1.bf16.msra.mxu0 0
        %454 = vmatprep.subr.bf16.mxu0 0
        %455 = vmatpush1.bf16.msra.mxu0 0
        %456 = vmatprep.mubr.bf16.mxu0 0
        %457 = vmatmul.mubr.bf16.gmra.mrb[0].mxu0 %v352
        %v458 = vpop.f32.mrb[0].mxu0
        %v459 = vadd.f32 %v374, %v458
        %v460 = vpop.f32.mrb[0].mxu0
        %v461 = vpop.f32.mrb[0].mxu0
        %v462 = vpop.f32.mrb[0].mxu0
        %463 = vdwg.mxu0
        %v464 = vmax.f32 %v459, 0.0
        %v465 = vpack.c.bf16 %v464, %v464
        %466 = vst [vmem:[#allocation2] sm:$0xf] %v465
        %v467 = vld [vmem:[#allocation2] sm:$0xf]
        %v468 = vld [vmem:[#allocation8] sm:$0xf]
        %v469 = vld [vmem:[#allocation8 + $0x4] sm:$0xf]
        %v470 = vld [vmem:[#allocation8 + $0x8] sm:$0xf]
        %v471 = vld [vmem:[#allocation8 + $0xc] sm:$0xf]
        %v472 = vld [vmem:[#allocation8 + $0x10] sm:$0xf]
        %v473 = vld [vmem:[#allocation8 + $0x14] sm:$0xf]
        %v474 = vld [vmem:[#allocation8 + $0x18] sm:$0xf]
        %v475 = vld [vmem:[#allocation8 + $0x1c] sm:$0xf]
        %v476 = vld [vmem:[#allocation8 + $0x20] sm:$0xf]
        %v477 = vld [vmem:[#allocation8 + $0x24] sm:$0xf]
        %v478 = vld [vmem:[#allocation8 + $0x28] sm:$0xf]
        %v479 = vld [vmem:[#allocation8 + $0x2c] sm:$0xf]
        %v480 = vld [vmem:[#allocation8 + $0x30] sm:$0xf]
        %v481 = vld [vmem:[#allocation8 + $0x34] sm:$0xf]
        %v482 = vld [vmem:[#allocation8 + $0x38] sm:$0xf]
        %v483 = vld [vmem:[#allocation8 + $0x3c] sm:$0xf]
        %v484 = vld [vmem:[%s4] sm:$0x1]
        %v486 = vlaneseq
        %v487 = vshrl.u32 %v486, 7
        %v488 = vsub.s32 0, %v487
        %v489 = vrot.slane %v484, %v488
        %v507 = vunpack.c.l.b16 %v468
        %v508 = vunpack.c.l.b16 %v469
        %v509 = vunpack.c.l.b16 %v470
        %v510 = vunpack.c.l.b16 %v471
        %v511 = vunpack.c.l.b16 %v472
        %v512 = vunpack.c.l.b16 %v473
        %v513 = vunpack.c.l.b16 %v474
        %v514 = vunpack.c.l.b16 %v475
        %v515 = vunpack.c.l.b16 %v476
        %v516 = vunpack.c.l.b16 %v477
        %v517 = vunpack.c.l.b16 %v478
        %v518 = vunpack.c.l.b16 %v479
        %v519 = vunpack.c.l.b16 %v480
        %v520 = vunpack.c.l.b16 %v481
        %v521 = vunpack.c.l.b16 %v482
        %v522 = vunpack.c.l.b16 %v483
        %v523 = vpack.c.b16 %v508, %v507
        %v524 = vpack.c.b16 %v510, %v509
        %v525 = vpack.c.b16 %v512, %v511
        %v526 = vpack.c.b16 %v514, %v513
        %v527 = vpack.c.b16 %v516, %v515
        %v528 = vpack.c.b16 %v518, %v517
        %v529 = vpack.c.b16 %v520, %v519
        %v530 = vpack.c.b16 %v522, %v521
        %539 = vmatprep.subr.bf16.mxu0 0
        %540 = vmatpush1.bf16.msra.mxu0 %v523
        %541 = vmatprep.subr.bf16.mxu0 0
        %542 = vmatpush1.bf16.msra.mxu0 %v524
        %543 = vmatprep.subr.bf16.mxu0 0
        %544 = vmatpush1.bf16.msra.mxu0 %v525
        %545 = vmatprep.subr.bf16.mxu0 0
        %546 = vmatpush1.bf16.msra.mxu0 %v526
        %547 = vmatprep.subr.bf16.mxu0 0
        %548 = vmatpush1.bf16.msra.mxu0 %v527
        %549 = vmatprep.subr.bf16.mxu0 0
        %550 = vmatpush1.bf16.msra.mxu0 %v528
        %551 = vmatprep.subr.bf16.mxu0 0
        %552 = vmatpush1.bf16.msra.mxu0 %v529
        %553 = vmatprep.subr.bf16.mxu0 0
        %554 = vmatpush1.bf16.msra.mxu0 %v530
        %555 = vmatprep.subr.bf16.mxu0 0
        %556 = vmatpush1.bf16.msra.mxu0 0
        %557 = vmatprep.subr.bf16.mxu0 0
        %558 = vmatpush1.bf16.msra.mxu0 0
        %559 = vmatprep.subr.bf16.mxu0 0
        %560 = vmatpush1.bf16.msra.mxu0 0
        %561 = vmatprep.subr.bf16.mxu0 0
        %562 = vmatpush1.bf16.msra.mxu0 0
        %563 = vmatprep.subr.bf16.mxu0 0
        %564 = vmatpush1.bf16.msra.mxu0 0
        %565 = vmatprep.subr.bf16.mxu0 0
        %566 = vmatpush1.bf16.msra.mxu0 0
        %567 = vmatprep.subr.bf16.mxu0 0
        %568 = vmatpush1.bf16.msra.mxu0 0
        %569 = vmatprep.subr.bf16.mxu0 0
        %570 = vmatpush1.bf16.msra.mxu0 0
        %571 = vmatprep.mubr.bf16.mxu0 0
        %572 = vmatmul.mubr.bf16.gmra.mrb[0].mxu0 %v467
        %v573 = vpop.f32.mrb[0].mxu0
        %v574 = vadd.f32 %v489, %v573
        %v575 = vpop.f32.mrb[0].mxu0
        %v576 = vpop.f32.mrb[0].mxu0
        %v577 = vpop.f32.mrb[0].mxu0
        %578 = vdwg.mxu0
        %v579 = vadd.f32 %v574, %v351
        %580 = vadd.xlane.f32.xlu0 %v579
        %v581 = vpop.xlane.xlu0 %580
        %v582 = vmul.f32 %v581, 0.03125
        %v583 = vsub.f32 %v579, %v582
        %v584 = vld [vmem:[%s7] sm:$0x1]
        %v586 = vlaneseq
        %v587 = vshrl.u32 %v586, 7
        %v588 = vsub.s32 0, %v587
        %v589 = vrot.slane %v584, %v588
        %v591 = vmul.f32 %v583, %v589
        %v592 = vmul.f32 %v591, %v591
        %593 = vadd.xlane.f32.xlu0 %v592
        %v594 = vpop.xlane.xlu0 %593
        %v595 = vmul.f32 %v594, 0.03125
        %v596 = vadd.f32 %v595, 1e-06
        %v597 = vrsqrt.pop %v596
        %v598 = vmul.f32 %v583, %v597
        %v599 = vld [vmem:[%s5] sm:$0x1]
        %v601 = vlaneseq
        %v602 = vshrl.u32 %v601, 7
        %v603 = vsub.s32 0, %v602
        %v604 = vrot.slane %v599, %v603
        %v606 = vmul.f32 %v598, %v604
        %v607 = vld [vmem:[%s6] sm:$0x1]
        %v609 = vlaneseq
        %v610 = vshrl.u32 %v609, 7
        %v611 = vsub.s32 0, %v610
        %v612 = vrot.slane %v607, %v611
        %v614 = vadd.f32 %v606, %v612
        %615 = vst [vmem:[%s349] sm:$0xff] %v614
        %s616 = sand.u32 %s207, 1
        %s617 = scalar_lea.sflag [#allocation5], %s616
        %s618 = sand.u32 %s207, 1
        %s619 = smul.addr %s618, 8
        %s620 = scalar_lea.vmem [#allocation9], %s619
        // Predicated region
        $region65: #{tpu_custom_call.1} parent=51 // pred_check
          %p621 = pneg %p217
        $region66: #{tpu_custom_call.1} parent=51 // pred_check_branch
          %623 = sbr.rel (%p621) target = $region68
        $region67: #{tpu_custom_call.1} parent=51 // pred_region
          %s625 = ssub.s32 128, 128
          %626 = vsyncadd %s617, %s625
          %s627 = smul.addr %s26, 128
          %s628 = scalar_lea.hbm %s8, %s627
          %s630 = sshll.u32 %s620, 4
          %s631 = int_to_ptr.vmem [resolvable:$true] %s630
          %633 = dma.vmem_to_hbm [thread:$0]  %s631, 128, %s628, %s617
        $region68: #{tpu_custom_call.1} parent=51 // pred_fallthru
          _
      $region52: #{tpu_custom_call.1} parent=5 // pred_fallthru
        _
      %p634 = scmp.le.s32.totalorder 2, %s21
      // Predicated region
      $region69: #{tpu_custom_call.1} parent=5 // pred_check
        %p635 = pneg %p634
      $region70: #{tpu_custom_call.1} parent=5 // pred_check_branch
        %637 = sbr.rel (%p635) target = $region72
      $region71: #{tpu_custom_call.1} parent=5 // pred_region
        %s638 = ssub.s32 %s21, 2
        // Predicated region
        $region73: #{tpu_custom_call.1} parent=71 // pred_check
          %p639 = pneg %p223
        $region74: #{tpu_custom_call.1} parent=71 // pred_check_branch
          %641 = sbr.rel (%p639) target = $region76
        $region75: #{tpu_custom_call.1} parent=71 // pred_region
          %s642 = sand.u32 %s208, 1
          %s643 = scalar_lea.sflag [#allocation5], %s642
          %s644 = sand.u32 %s208, 1
          %s645 = smul.addr %s644, 8
          %s646 = scalar_lea.vmem [#allocation9], %s645
          %647 = dma.done %s643, 128
        $region76: #{tpu_custom_call.1} parent=71 // pred_fallthru
          _
      $region72: #{tpu_custom_call.1} parent=5 // pred_fallthru
        _
    $region6: #{tpu_custom_call.1} parent=1 // loop_footer
      %s25 = sadd.s32 1, %s21
    $region7: #{tpu_custom_call.1} parent=1 // loop_footer_branch
      %20 = sbr.rel target = $region3
    $region8: #{tpu_custom_call.1} parent=1 // loop_exit
      _
    %648 = vsyncpa [#allocation4], 1
    %s649 = scalar_lea.sflag [#allocation4], 1
    %650 = vsyncpa %s649, 1
    %651 = vsyncpa [#allocation7], 1
    %652 = vsyncpa [#allocation5], 1
    %s653 = scalar_lea.sflag [#allocation5], 1
    %654 = vsyncpa %s653, 1

</llo_original>
